<compile_context>
chip_gen: v7x
topology: tpu7x:2x2x1
jax: 0.10.0
libtpu: 0.0.40
codegen_flags: <defaults>
</compile_context>

<pallas_src>
import functools

import jax
import jax.numpy as jnp
from jax.experimental import pallas as pl
from jax.experimental.pallas import tpu as pltpu


def _sigmoid(z):
    # sigmoid(z) == 0.5*tanh(0.5*z)+0.5 ; tanh stays on the EUP slot.
    return 0.5 * jnp.tanh(0.5 * z) + 0.5


def ca_attention_kernel(x_ref, pool_ref, expand_ref, w1_ref, w2t_ref, cw_ref,
                        cb_ref, o_ref, *, H):
    Bt, C, L = x_ref.shape
    R = Bt * C

    xb = x_ref[...]                                  # (Bt, C, L) lane-dense
    x2 = xb.reshape(R, L)                            # collapse leading dims only

    # Directional pools of x: [mean over W per h | mean over H per w], one MXU
    # matmul against the constant (L, H+W) pooling matrix.
    pools = jnp.dot(x2, pool_ref[...],
                    preferred_element_type=jnp.float32,
                    precision=jax.lax.Precision.HIGHEST)          # (R, H+W)
    pools = pools.reshape(Bt, C, -1)                              # (Bt, C, H+W)

    # --- SE channel gate: lane-major row vectors, VPU-only (no MXU matvec) ---
    gap = jnp.mean(pools[:, :, :H], axis=-1)                      # (Bt, C) == global mean
    hidden = jnp.maximum(
        jnp.sum(gap[:, None, :] * w1_ref[...][None, :, :], axis=-1), 0.0)    # (Bt, C16)
    attn = _sigmoid(
        jnp.sum(hidden[:, :, None] * w2t_ref[...][None, :, :], axis=1))      # (Bt, C)

    # hp/wp as channel means of the gated pools (exact by linearity; xs never built).
    hpwp = jnp.mean(attn[:, :, None] * pools, axis=1)             # (Bt, H+W)

    # 1x1-conv pre-activation, built lane-densely via one small MXU matmul
    # against the 0/1 expansion matrix (no big in-kernel reshape / tiling):
    #   pre[b, c, h*W+w] = cw0[c]*hp[b,h] + cw1[c]*wp[b,w] + cb[c]
    coeff = (cw_ref[...][None, :, :] * hpwp[:, None, :]).reshape(R, -1)      # (R, H+W)
    pre = jnp.dot(coeff, expand_ref[...],
                  preferred_element_type=jnp.float32,
                  precision=jax.lax.Precision.HIGHEST).reshape(Bt, C, L)
    pre = pre + cb_ref[...][None, :, :]                           # (Bt, C, L)

    # Fused output pass: sigmoid gate * channel gate * x, single lane-dense store.
    o_ref[...] = (_sigmoid(pre) * (attn[:, :, None] * xb)).astype(o_ref.dtype)


def ca_attention(x, w1, w2, conv_w, conv_b, *, block_batch=None):
    B, C, H, W = x.shape
    L = H * W
    C16 = w1.shape[0]

    # Lane-dense layout: flatten spatial dims so the last axis (H*W) maps to lanes.
    x_flat = x.reshape(B, C, L)

    # Tiny constant matrices (built once in the wrapper, outside the kernel).
    h_of_l = jnp.arange(L) // W
    w_of_l = jnp.arange(L) % W
    onehot_h = (h_of_l[:, None] == jnp.arange(H)[None, :]).astype(jnp.float32)  # (L, H)
    onehot_w = (w_of_l[:, None] == jnp.arange(W)[None, :]).astype(jnp.float32)  # (L, W)
    pool_mat = jnp.concatenate([onehot_h / W, onehot_w / H], axis=1)            # (L, H+W)
    expand_mat = jnp.concatenate([onehot_h.T, onehot_w.T], axis=0)              # (H+W, L)

    # SE / conv weights pre-arranged lane-major.
    w1_f = w1.astype(jnp.float32)                                # (C16, C)
    w2t = w2.astype(jnp.float32).T                               # (C16, C)
    cw_flat = jnp.concatenate(
        [jnp.broadcast_to(conv_w[:, 0:1], (C, H)),
         jnp.broadcast_to(conv_w[:, 1:2], (C, W))], axis=1).astype(jnp.float32)  # (C, H+W)
    cb_col = conv_b.reshape(C, 1).astype(jnp.float32)            # (C, 1)

    # Batch blocking: target ~2 MiB input blocks, but keep >=2 grid steps when
    # possible so both v7x TensorCores get work.
    if block_batch is None:
        bytes_per_batch = C * L * x.dtype.itemsize
        bt = max(1, min(B, (2 << 20) // max(bytes_per_batch, 1)))
        if B >= 2:
            bt = max(1, min(bt, B // 2))
        while B % bt:
            bt -= 1
        block_batch = bt
    Bt = block_batch
    assert B % Bt == 0
    grid = (B // Bt,)

    # VMEM budget: in/out blocks are double-buffered plus a few block-sized temps;
    # keep headroom under v7x's 64 MiB VMEM.
    block_bytes = Bt * C * L * x.dtype.itemsize
    vmem_bytes = int(min(48 << 20, max(24 << 20, 10 * block_bytes)))

    kernel = functools.partial(ca_attention_kernel, H=H)
    out_flat = pl.pallas_call(
        kernel,
        out_shape=jax.ShapeDtypeStruct((B, C, L), x.dtype),
        grid_spec=pltpu.PrefetchScalarGridSpec(
            num_scalar_prefetch=0,
            grid=grid,
            in_specs=[
                pl.BlockSpec((Bt, C, L), lambda b: (b, 0, 0)),
                pl.BlockSpec((L, H + W), lambda b: (0, 0)),
                pl.BlockSpec((H + W, L), lambda b: (0, 0)),
                pl.BlockSpec((C16, C), lambda b: (0, 0)),
                pl.BlockSpec((C16, C), lambda b: (0, 0)),
                pl.BlockSpec((C, H + W), lambda b: (0, 0)),
                pl.BlockSpec((C, 1), lambda b: (0, 0)),
            ],
            out_specs=pl.BlockSpec((Bt, C, L), lambda b: (b, 0, 0)),
        ),
        compiler_params=pltpu.CompilerParams(
            dimension_semantics=("parallel",),
            vmem_limit_bytes=vmem_bytes,
        ),
    )(x_flat, pool_mat, expand_mat, w1_f, w2t, cw_flat, cb_col)
    return out_flat.reshape(B, C, H, W)


def ca_attention_ref(x, w1, w2, conv_w, conv_b):
    """Pure-JAX reference mirroring the PyTorch forward."""
    gap = jnp.mean(x, axis=(2, 3))                               # (B, C)
    hidden = jnp.maximum(gap @ w1.T, 0.0)                        # (B, C//16)
    attn = jax.nn.sigmoid(hidden @ w2.T)                         # (B, C)
    xs = x * attn[:, :, None, None]
    hp = jnp.mean(xs, axis=(1, 3))                               # (B, H)
    wp = jnp.mean(xs, axis=(1, 2))                               # (B, W)
    pre = (conv_w[None, :, 0, None, None] * hp[:, None, :, None]
           + conv_w[None, :, 1, None, None] * wp[:, None, None, :]
           + conv_b[None, :, None, None])
    return jax.nn.sigmoid(pre) * xs


if __name__ == "__main__":
    B, C, H, W = 2, 32, 16, 16          # C >= 16 so C // 16 >= 1
    C16 = C // 16

    key = jax.random.PRNGKey(0)
    kx, k1, k2, kcw, kcb = jax.random.split(key, 5)
    x = jax.random.normal(kx, (B, C, H, W), dtype=jnp.float32)
    w1 = jax.random.normal(k1, (C16, C), dtype=jnp.float32) * 0.1     # Linear(C, C//16), no bias
    w2 = jax.random.normal(k2, (C, C16), dtype=jnp.float32) * 0.1     # Linear(C//16, C), no bias
    conv_w = jax.random.normal(kcw, (C, 2), dtype=jnp.float32) * 0.1  # Conv2d(2, C, 1) weight
    conv_b = jax.random.normal(kcb, (C,), dtype=jnp.float32) * 0.1    # Conv2d bias

    out = jax.block_until_ready(ca_attention(x, w1, w2, conv_w, conv_b))
    ref = ca_attention_ref(x, w1, w2, conv_w, conv_b)
    max_err = float(jnp.max(jnp.abs(out - ref)))
    assert max_err < 5e-4, max_err      # reduction order / fused-sigmoid differ slightly
    print("KERNEL_OK")
</pallas_src>

<mosaic_0001>
module attributes {stable_mosaic.version = 11 : i64} {
  func.func @ca_attention_kernel(%arg0: i32, %arg1: memref<1x32x256xf32, #tpu.memory_space<vmem>>, %arg2: memref<256x32xf32, #tpu.memory_space<vmem>>, %arg3: memref<32x256xf32, #tpu.memory_space<vmem>>, %arg4: memref<2x32xf32, #tpu.memory_space<vmem>>, %arg5: memref<2x32xf32, #tpu.memory_space<vmem>>, %arg6: memref<32x32xf32, #tpu.memory_space<vmem>>, %arg7: memref<32x1xf32, #tpu.memory_space<vmem>>, %arg8: memref<1x32x256xf32, #tpu.memory_space<vmem>>) attributes {dimension_semantics = [#tpu.dimension_semantics<parallel>], iteration_bounds = array<i64: 2>, scalar_prefetch = 0 : i64, scratch_operands = 0 : i64, tpu.core_type = #tpu.core_type<tc>, window_params = [{transform_indices = @transform_0, window_bounds = array<i64: 1, 32, 256>}, {pipeline_mode = #tpu.pipeline_mode<synchronous>, transform_indices = @transform_1, window_bounds = array<i64: 256, 32>}, {pipeline_mode = #tpu.pipeline_mode<synchronous>, transform_indices = @transform_2, window_bounds = array<i64: 32, 256>}, {pipeline_mode = #tpu.pipeline_mode<synchronous>, transform_indices = @transform_3, window_bounds = array<i64: 2, 32>}, {pipeline_mode = #tpu.pipeline_mode<synchronous>, transform_indices = @transform_4, window_bounds = array<i64: 2, 32>}, {pipeline_mode = #tpu.pipeline_mode<synchronous>, transform_indices = @transform_5, window_bounds = array<i64: 32, 32>}, {pipeline_mode = #tpu.pipeline_mode<synchronous>, transform_indices = @transform_6, window_bounds = array<i64: 32, 1>}, {transform_indices = @transform_7, window_bounds = array<i64: 1, 32, 256>}]} {
    %c0 = arith.constant 0 : index
    %c0_0 = arith.constant 0 : index
    %c0_1 = arith.constant 0 : index
    %0 = vector.load %arg1[%c0, %c0_0, %c0_1] : memref<1x32x256xf32, #tpu.memory_space<vmem>>, vector<1x32x256xf32>
    %1 = vector.shape_cast %0 : vector<1x32x256xf32> to vector<32x256xf32>
    %c0_2 = arith.constant 0 : index
    %c0_3 = arith.constant 0 : index
    %2 = vector.load %arg2[%c0_2, %c0_3] : memref<256x32xf32, #tpu.memory_space<vmem>>, vector<256x32xf32>
    %cst = arith.constant dense<0.000000e+00> : vector<32x32xf32>
    %3 = tpu.matmul %1, %2, %cst {dimension_numbers = #tpu.dot_dimension_numbers<[1], [0], [0], [1], [0, 0, 1, 1], [], []>, precision = #tpu.contract_precision<fp32>} : vector<32x256xf32>, vector<256x32xf32>, vector<32x32xf32> -> vector<32x32xf32>
    %4 = vector.shape_cast %3 : vector<32x32xf32> to vector<1x32x32xf32>
    %5 = vector.extract_strided_slice %4 {offsets = [0, 0, 0], sizes = [1, 32, 16], strides = [1, 1, 1]} : vector<1x32x32xf32> to vector<1x32x16xf32>
    %cst_4 = arith.constant dense<0.000000e+00> : vector<1x32xf32>
    %6 = vector.multi_reduction <add>, %5, %cst_4 [2] : vector<1x32x16xf32> to vector<1x32xf32>
    %cst_5 = arith.constant 1.600000e+01 : f32
    %7 = vector.broadcast %cst_5 : f32 to vector<1x32xf32>
    %8 = arith.divf %6, %7 : vector<1x32xf32>
    %9 = vector.shape_cast %8 : vector<1x32xf32> to vector<1x1x32xf32>
    %c0_6 = arith.constant 0 : index
    %c0_7 = arith.constant 0 : index
    %10 = vector.load %arg4[%c0_6, %c0_7] : memref<2x32xf32, #tpu.memory_space<vmem>>, vector<2x32xf32>
    %11 = vector.shape_cast %10 : vector<2x32xf32> to vector<1x2x32xf32>
    %12 = vector.broadcast %9 : vector<1x1x32xf32> to vector<1x2x32xf32>
    %13 = arith.mulf %12, %11 : vector<1x2x32xf32>
    %cst_8 = arith.constant dense<0.000000e+00> : vector<1x2xf32>
    %14 = vector.multi_reduction <add>, %13, %cst_8 [2] : vector<1x2x32xf32> to vector<1x2xf32>
    %cst_9 = arith.constant 0.000000e+00 : f32
    %15 = vector.broadcast %cst_9 : f32 to vector<1x2xf32>
    %16 = arith.maximumf %14, %15 : vector<1x2xf32>
    %17 = vector.shape_cast %16 : vector<1x2xf32> to vector<1x2x1xf32>
    %c0_10 = arith.constant 0 : index
    %c0_11 = arith.constant 0 : index
    %18 = vector.load %arg5[%c0_10, %c0_11] : memref<2x32xf32, #tpu.memory_space<vmem>>, vector<2x32xf32>
    %19 = vector.shape_cast %18 : vector<2x32xf32> to vector<1x2x32xf32>
    %20 = vector.broadcast %17 : vector<1x2x1xf32> to vector<1x2x32xf32>
    %21 = arith.mulf %20, %19 : vector<1x2x32xf32>
    %cst_12 = arith.constant dense<0.000000e+00> : vector<1x32xf32>
    %22 = vector.multi_reduction <add>, %21, %cst_12 [1] : vector<1x2x32xf32> to vector<1x32xf32>
    %cst_13 = arith.constant 5.000000e-01 : f32
    %23 = vector.broadcast %cst_13 : f32 to vector<1x32xf32>
    %24 = arith.mulf %23, %22 : vector<1x32xf32>
    %25 = math.tanh %24 : vector<1x32xf32>
    %cst_14 = arith.constant 5.000000e-01 : f32
    %26 = vector.broadcast %cst_14 : f32 to vector<1x32xf32>
    %27 = arith.mulf %26, %25 : vector<1x32xf32>
    %cst_15 = arith.constant 5.000000e-01 : f32
    %28 = vector.broadcast %cst_15 : f32 to vector<1x32xf32>
    %29 = arith.addf %27, %28 : vector<1x32xf32>
    %30 = vector.shape_cast %29 : vector<1x32xf32> to vector<1x32x1xf32>
    %31 = vector.broadcast %30 : vector<1x32x1xf32> to vector<1x32x32xf32>
    %32 = arith.mulf %31, %4 : vector<1x32x32xf32>
    %cst_16 = arith.constant dense<0.000000e+00> : vector<1x32xf32>
    %33 = vector.multi_reduction <add>, %32, %cst_16 [1] : vector<1x32x32xf32> to vector<1x32xf32>
    %cst_17 = arith.constant 3.200000e+01 : f32
    %34 = vector.broadcast %cst_17 : f32 to vector<1x32xf32>
    %35 = arith.divf %33, %34 : vector<1x32xf32>
    %c0_18 = arith.constant 0 : index
    %c0_19 = arith.constant 0 : index
    %36 = vector.load %arg6[%c0_18, %c0_19] : memref<32x32xf32, #tpu.memory_space<vmem>>, vector<32x32xf32>
    %37 = vector.shape_cast %36 : vector<32x32xf32> to vector<1x32x32xf32>
    %38 = vector.shape_cast %35 : vector<1x32xf32> to vector<1x1x32xf32>
    %39 = vector.broadcast %38 : vector<1x1x32xf32> to vector<1x32x32xf32>
    %40 = arith.mulf %37, %39 : vector<1x32x32xf32>
    %41 = vector.shape_cast %40 : vector<1x32x32xf32> to vector<32x32xf32>
    %c0_20 = arith.constant 0 : index
    %c0_21 = arith.constant 0 : index
    %42 = vector.load %arg3[%c0_20, %c0_21] : memref<32x256xf32, #tpu.memory_space<vmem>>, vector<32x256xf32>
    %cst_22 = arith.constant dense<0.000000e+00> : vector<32x256xf32>
    %43 = tpu.matmul %41, %42, %cst_22 {dimension_numbers = #tpu.dot_dimension_numbers<[1], [0], [0], [1], [0, 0, 1, 1], [], []>, precision = #tpu.contract_precision<fp32>} : vector<32x32xf32>, vector<32x256xf32>, vector<32x256xf32> -> vector<32x256xf32>
    %44 = vector.shape_cast %43 : vector<32x256xf32> to vector<1x32x256xf32>
    %c0_23 = arith.constant 0 : index
    %c0_24 = arith.constant 0 : index
    %45 = vector.load %arg7[%c0_23, %c0_24] : memref<32x1xf32, #tpu.memory_space<vmem>>, vector<32x1xf32>
    %46 = vector.shape_cast %45 : vector<32x1xf32> to vector<1x32x1xf32>
    %47 = vector.broadcast %46 : vector<1x32x1xf32> to vector<1x32x256xf32>
    %48 = arith.addf %44, %47 : vector<1x32x256xf32>
    %cst_25 = arith.constant 5.000000e-01 : f32
    %49 = vector.broadcast %cst_25 : f32 to vector<1x32x256xf32>
    %50 = arith.mulf %49, %48 : vector<1x32x256xf32>
    %51 = math.tanh %50 : vector<1x32x256xf32>
    %cst_26 = arith.constant 5.000000e-01 : f32
    %52 = vector.broadcast %cst_26 : f32 to vector<1x32x256xf32>
    %53 = arith.mulf %52, %51 : vector<1x32x256xf32>
    %cst_27 = arith.constant 5.000000e-01 : f32
    %54 = vector.broadcast %cst_27 : f32 to vector<1x32x256xf32>
    %55 = arith.addf %53, %54 : vector<1x32x256xf32>
    %56 = vector.shape_cast %29 : vector<1x32xf32> to vector<1x32x1xf32>
    %57 = vector.broadcast %56 : vector<1x32x1xf32> to vector<1x32x256xf32>
    %58 = arith.mulf %57, %0 : vector<1x32x256xf32>
    %59 = arith.mulf %55, %58 : vector<1x32x256xf32>
    %c0_28 = arith.constant 0 : index
    %c0_29 = arith.constant 0 : index
    %c0_30 = arith.constant 0 : index
    %60 = vector.load %arg8[%c0_28, %c0_29, %c0_30] : memref<1x32x256xf32, #tpu.memory_space<vmem>>, vector<1x32x256xf32>
    tpu.vector_store %arg8[%c0_28, %c0_29, %c0_30], %59 {strides = array<i32>} : memref<1x32x256xf32, #tpu.memory_space<vmem>>, vector<1x32x256xf32>,
    return
  }
  func.func @transform_0(%arg0: i32) -> (i32, i32, i32) {
    %c0_i32 = arith.constant 0 : i32
    %c0_i32_0 = arith.constant 0 : i32
    %c0_i32_1 = arith.constant 0 : i32
    return %arg0, %c0_i32, %c0_i32_0 : i32, i32, i32
  }
  func.func @transform_1(%arg0: i32) -> (i32, i32) {
    %c0_i32 = arith.constant 0 : i32
    %c0_i32_0 = arith.constant 0 : i32
    %c0_i32_1 = arith.constant 0 : i32
    return %c0_i32, %c0_i32_0 : i32, i32
  }
  func.func @transform_2(%arg0: i32) -> (i32, i32) {
    %c0_i32 = arith.constant 0 : i32
    %c0_i32_0 = arith.constant 0 : i32
    %c0_i32_1 = arith.constant 0 : i32
    return %c0_i32, %c0_i32_0 : i32, i32
  }
  func.func @transform_3(%arg0: i32) -> (i32, i32) {
    %c0_i32 = arith.constant 0 : i32
    %c0_i32_0 = arith.constant 0 : i32
    %c0_i32_1 = arith.constant 0 : i32
    return %c0_i32, %c0_i32_0 : i32, i32
  }
  func.func @transform_4(%arg0: i32) -> (i32, i32) {
    %c0_i32 = arith.constant 0 : i32
    %c0_i32_0 = arith.constant 0 : i32
    %c0_i32_1 = arith.constant 0 : i32
    return %c0_i32, %c0_i32_0 : i32, i32
  }
  func.func @transform_5(%arg0: i32) -> (i32, i32) {
    %c0_i32 = arith.constant 0 : i32
    %c0_i32_0 = arith.constant 0 : i32
    %c0_i32_1 = arith.constant 0 : i32
    return %c0_i32, %c0_i32_0 : i32, i32
  }
  func.func @transform_6(%arg0: i32) -> (i32, i32) {
    %c0_i32 = arith.constant 0 : i32
    %c0_i32_0 = arith.constant 0 : i32
    %c0_i32_1 = arith.constant 0 : i32
    return %c0_i32, %c0_i32_0 : i32, i32
  }
  func.func @transform_7(%arg0: i32) -> (i32, i32, i32) {
    %c0_i32 = arith.constant 0 : i32
    %c0_i32_0 = arith.constant 0 : i32
    %c0_i32_1 = arith.constant 0 : i32
    return %arg0, %c0_i32, %c0_i32_0 : i32, i32, i32
  }
}

</mosaic_0001>

<llo_original>
// kernel: tpu_custom_call.1
$region0: #{tpu_custom_call.1}
  #allocation0 [shape = 'u32[]', space=smem, size = 0x4, offset = 0x4, fixed_abs, tag = 'smem constant byte address 0x4 - core index']
  #allocation1 [shape = 'u32[144,128]{1,0:T(1,128)}', space=vmem, size = 0x12000, scoped, tag = 'internal scratch']
  %s0 = inlined_call_operand.vmem [shape: f32[2,32,256], index: 0, kind: input, shape index: {}]
  %s1 = inlined_call_operand.vmem [shape: f32[256,32], index: 1, kind: input, shape index: {}]
  %s2 = inlined_call_operand.vmem [shape: f32[32,256], index: 2, kind: input, shape index: {}]
  %s3 = inlined_call_operand.vmem [shape: f32[2,32], index: 3, kind: input, shape index: {}]
  %s4 = inlined_call_operand.vmem [shape: f32[2,32], index: 4, kind: input, shape index: {}]
  %s5 = inlined_call_operand.vmem [shape: f32[32,32], index: 5, kind: input, shape index: {}]
  %s6 = inlined_call_operand.vmem [shape: f32[32,1], index: 6, kind: input, shape index: {}]
  %s7 = inlined_call_operand.hbm [shape: f32[2,32,256], index: 7, kind: output, shape index: {}]
  %s8 = sld [smem:[#allocation0]]
  $region61: #{tpu_custom_call.1} parent=0
    _
  %s10 = ssub.s32 1, %s8
  %s11 = scalar_select 0, %s10, %s8
  $region1: #{tpu_custom_call.1} parent=0
    #allocation2 [shape = 'u8[65536]{0}', space=vmem, size = 0x10000, scoped, tag = 'output window, operand 0']
    #allocation3 [shape = 's32[2]{0}', space=sflag, size = 0x8, scoped, tag = 'scoped memory for tpu_custom_call.1']
    %12 = vsyncpa [#allocation3], 0
    %s13 = scalar_lea.sflag [#allocation3], 1
    %14 = vsyncpa %s13, 0
    loop: start=0, step=1, limit=4
    $region2: #{tpu_custom_call.1} parent=1 // loop_pre_header
      _
    $region3: #{tpu_custom_call.1} parent=1 // loop_header
      %s16 = sphi 0, %s20
      %p17 = scmp.ge.s32.totalorder %s16, 4
      %s26 = sphi 0, %s28
      %s29 = sphi 0, %s26
      %s30 = sphi 0, %s29
      %s46 = sphi 0, %s30
      %s50 = sphi 0, %s50
      %s52 = sphi 0, %s50
      %s53 = sphi 0, %s52
      %s67 = sphi 0, %s53
      %s71 = sphi 0, %s71
      %s73 = sphi 0, %s71
      %s74 = sphi 0, %s73
      %s88 = sphi 0, %s74
      %s92 = sphi 0, %s92
      %s94 = sphi 0, %s92
      %s95 = sphi 0, %s94
      %s109 = sphi 0, %s95
      %s113 = sphi 0, %s113
      %s115 = sphi 0, %s113
      %s116 = sphi 0, %s115
      %s130 = sphi 0, %s116
      %s134 = sphi 0, %s134
      %s136 = sphi 0, %s134
      %s137 = sphi 0, %s136
      %s151 = sphi 0, %s137
      %s155 = sphi 0, %s155
      %s157 = sphi 0, %s155
      %s158 = sphi 0, %s157
      %s172 = sphi 0, %s158
      %s178 = sphi 0, %s180
      %s181 = sphi 0, %s178
      %s182 = sphi 0, %s181
      %s198 = sphi 0, %s182
    $region4: #{tpu_custom_call.1} parent=1 // loop_header_branch
      %19 = sbr.rel (%p17) target = $region8
    $region5: #{tpu_custom_call.1} parent=1 // loop_body
      %s21 = ssub.s32 %s16, 1
      %s22 = ssub.s32 %s16, 2
      %s23 = sadd.s32 %s16, 1
      %s24 = ssub.s32 %s16, %s23
      %p25 = scmp.eq.s32.totalorder %s24, 0
      %s27 = sadd.s32 %s26, 1
      %s28 = scalar_select %p25, %s26, %s27
      %p31 = pneg %p25
      %p32 = scmp.eq.s32.totalorder %s16, 1
      %p33 = por %p31, %p32
      %p34 = scmp.ne.s32.totalorder %s26, %s29
      %p35 = scmp.eq.s32.totalorder %s16, 0
      %p36 = por %p34, %p35
      %p37 = scmp.ne.s32.totalorder %s26, %s29
      %p38 = scmp.eq.s32.totalorder %s21, 1
      %p39 = por %p37, %p38
      %p40 = scmp.ne.s32.totalorder %s29, %s30
      %p41 = scmp.eq.s32.totalorder %s21, 0
      %p42 = por %p40, %p41
      %p43 = scmp.ne.s32.totalorder %s29, %s30
      %p44 = scmp.eq.s32.totalorder %s22, 1
      %p45 = por %p43, %p44
      %p47 = scmp.ne.s32.totalorder %s30, %s46
      %p48 = scmp.eq.s32.totalorder %s22, 0
      %p49 = por %p47, %p48
      %s51 = sadd.s32 %s50, 1
      %p54 = scmp.eq.s32.totalorder %s16, 1
      %p55 = scmp.ne.s32.totalorder %s50, %s52
      %p56 = scmp.eq.s32.totalorder %s16, 0
      %p57 = por %p55, %p56
      %p58 = scmp.ne.s32.totalorder %s50, %s52
      %p59 = scmp.eq.s32.totalorder %s21, 1
      %p60 = por %p58, %p59
      %p61 = scmp.ne.s32.totalorder %s52, %s53
      %p62 = scmp.eq.s32.totalorder %s21, 0
      %p63 = por %p61, %p62
      %p64 = scmp.ne.s32.totalorder %s52, %s53
      %p65 = scmp.eq.s32.totalorder %s22, 1
      %p66 = por %p64, %p65
      %p68 = scmp.ne.s32.totalorder %s53, %s67
      %p69 = scmp.eq.s32.totalorder %s22, 0
      %p70 = por %p68, %p69
      %s72 = sadd.s32 %s71, 1
      %p75 = scmp.eq.s32.totalorder %s16, 1
      %p76 = scmp.ne.s32.totalorder %s71, %s73
      %p77 = scmp.eq.s32.totalorder %s16, 0
      %p78 = por %p76, %p77
      %p79 = scmp.ne.s32.totalorder %s71, %s73
      %p80 = scmp.eq.s32.totalorder %s21, 1
      %p81 = por %p79, %p80
      %p82 = scmp.ne.s32.totalorder %s73, %s74
      %p83 = scmp.eq.s32.totalorder %s21, 0
      %p84 = por %p82, %p83
      %p85 = scmp.ne.s32.totalorder %s73, %s74
      %p86 = scmp.eq.s32.totalorder %s22, 1
      %p87 = por %p85, %p86
      %p89 = scmp.ne.s32.totalorder %s74, %s88
      %p90 = scmp.eq.s32.totalorder %s22, 0
      %p91 = por %p89, %p90
      %s93 = sadd.s32 %s92, 1
      %p96 = scmp.eq.s32.totalorder %s16, 1
      %p97 = scmp.ne.s32.totalorder %s92, %s94
      %p98 = scmp.eq.s32.totalorder %s16, 0
      %p99 = por %p97, %p98
      %p100 = scmp.ne.s32.totalorder %s92, %s94
      %p101 = scmp.eq.s32.totalorder %s21, 1
      %p102 = por %p100, %p101
      %p103 = scmp.ne.s32.totalorder %s94, %s95
      %p104 = scmp.eq.s32.totalorder %s21, 0
      %p105 = por %p103, %p104
      %p106 = scmp.ne.s32.totalorder %s94, %s95
      %p107 = scmp.eq.s32.totalorder %s22, 1
      %p108 = por %p106, %p107
      %p110 = scmp.ne.s32.totalorder %s95, %s109
      %p111 = scmp.eq.s32.totalorder %s22, 0
      %p112 = por %p110, %p111
      %s114 = sadd.s32 %s113, 1
      %p117 = scmp.eq.s32.totalorder %s16, 1
      %p118 = scmp.ne.s32.totalorder %s113, %s115
      %p119 = scmp.eq.s32.totalorder %s16, 0
      %p120 = por %p118, %p119
      %p121 = scmp.ne.s32.totalorder %s113, %s115
      %p122 = scmp.eq.s32.totalorder %s21, 1
      %p123 = por %p121, %p122
      %p124 = scmp.ne.s32.totalorder %s115, %s116
      %p125 = scmp.eq.s32.totalorder %s21, 0
      %p126 = por %p124, %p125
      %p127 = scmp.ne.s32.totalorder %s115, %s116
      %p128 = scmp.eq.s32.totalorder %s22, 1
      %p129 = por %p127, %p128
      %p131 = scmp.ne.s32.totalorder %s116, %s130
      %p132 = scmp.eq.s32.totalorder %s22, 0
      %p133 = por %p131, %p132
      %s135 = sadd.s32 %s134, 1
      %p138 = scmp.eq.s32.totalorder %s16, 1
      %p139 = scmp.ne.s32.totalorder %s134, %s136
      %p140 = scmp.eq.s32.totalorder %s16, 0
      %p141 = por %p139, %p140
      %p142 = scmp.ne.s32.totalorder %s134, %s136
      %p143 = scmp.eq.s32.totalorder %s21, 1
      %p144 = por %p142, %p143
      %p145 = scmp.ne.s32.totalorder %s136, %s137
      %p146 = scmp.eq.s32.totalorder %s21, 0
      %p147 = por %p145, %p146
      %p148 = scmp.ne.s32.totalorder %s136, %s137
      %p149 = scmp.eq.s32.totalorder %s22, 1
      %p150 = por %p148, %p149
      %p152 = scmp.ne.s32.totalorder %s137, %s151
      %p153 = scmp.eq.s32.totalorder %s22, 0
      %p154 = por %p152, %p153
      %s156 = sadd.s32 %s155, 1
      %p159 = scmp.eq.s32.totalorder %s16, 1
      %p160 = scmp.ne.s32.totalorder %s155, %s157
      %p161 = scmp.eq.s32.totalorder %s16, 0
      %p162 = por %p160, %p161
      %p163 = scmp.ne.s32.totalorder %s155, %s157
      %p164 = scmp.eq.s32.totalorder %s21, 1
      %p165 = por %p163, %p164
      %p166 = scmp.ne.s32.totalorder %s157, %s158
      %p167 = scmp.eq.s32.totalorder %s21, 0
      %p168 = por %p166, %p167
      %p169 = scmp.ne.s32.totalorder %s157, %s158
      %p170 = scmp.eq.s32.totalorder %s22, 1
      %p171 = por %p169, %p170
      %p173 = scmp.ne.s32.totalorder %s158, %s172
      %p174 = scmp.eq.s32.totalorder %s22, 0
      %p175 = por %p173, %p174
      %s176 = ssub.s32 %s16, %s23
      %p177 = scmp.eq.s32.totalorder %s176, 0
      %s179 = sadd.s32 %s178, 1
      %s180 = scalar_select %p177, %s178, %s179
      %p183 = pneg %p177
      %p184 = scmp.eq.s32.totalorder %s16, 1
      %p185 = por %p183, %p184
      %p186 = scmp.ne.s32.totalorder %s178, %s181
      %p187 = scmp.eq.s32.totalorder %s16, 0
      %p188 = por %p186, %p187
      %p189 = scmp.ne.s32.totalorder %s178, %s181
      %p190 = scmp.eq.s32.totalorder %s21, 1
      %p191 = por %p189, %p190
      %p192 = scmp.ne.s32.totalorder %s181, %s182
      %p193 = scmp.eq.s32.totalorder %s21, 0
      %p194 = por %p192, %p193
      %p195 = scmp.ne.s32.totalorder %s181, %s182
      %p196 = scmp.eq.s32.totalorder %s22, 1
      %p197 = por %p195, %p196
      %p199 = scmp.ne.s32.totalorder %s182, %s198
      %p200 = scmp.eq.s32.totalorder %s22, 0
      %p201 = por %p199, %p200
      %p202 = scmp.le.s32.totalorder 1, %s16
      %p203 = scmp.lt.s32.totalorder %s16, 3
      %p204 = pnand %p202, %p203
      %p205 = pneg %p204
      // Predicated region
      $region9: #{tpu_custom_call.1} parent=5 // pred_check
        _
      $region10: #{tpu_custom_call.1} parent=5 // pred_check_branch
        %207 = sbr.rel (%p204) target = $region12
      $region11: #{tpu_custom_call.1} parent=5 // pred_region
        %s208 = ssub.s32 %s16, 1
        // Predicated region
        $region13: #{tpu_custom_call.1} parent=11 // pred_check
          %p209 = pneg %p63
        $region14: #{tpu_custom_call.1} parent=11 // pred_check_branch
          %211 = sbr.rel (%p209) target = $region16
        $region15: #{tpu_custom_call.1} parent=11 // pred_region
          _
        $region16: #{tpu_custom_call.1} parent=11 // pred_fallthru
          _
        // Predicated region
        $region17: #{tpu_custom_call.1} parent=11 // pred_check
          %p212 = pneg %p84
        $region18: #{tpu_custom_call.1} parent=11 // pred_check_branch
          %214 = sbr.rel (%p212) target = $region20
        $region19: #{tpu_custom_call.1} parent=11 // pred_region
          _
        $region20: #{tpu_custom_call.1} parent=11 // pred_fallthru
          _
        // Predicated region
        $region21: #{tpu_custom_call.1} parent=11 // pred_check
          %p215 = pneg %p105
        $region22: #{tpu_custom_call.1} parent=11 // pred_check_branch
          %217 = sbr.rel (%p215) target = $region24
        $region23: #{tpu_custom_call.1} parent=11 // pred_region
          _
        $region24: #{tpu_custom_call.1} parent=11 // pred_fallthru
          _
        // Predicated region
        $region25: #{tpu_custom_call.1} parent=11 // pred_check
          %p218 = pneg %p126
        $region26: #{tpu_custom_call.1} parent=11 // pred_check_branch
          %220 = sbr.rel (%p218) target = $region28
        $region27: #{tpu_custom_call.1} parent=11 // pred_region
          _
        $region28: #{tpu_custom_call.1} parent=11 // pred_fallthru
          _
        // Predicated region
        $region29: #{tpu_custom_call.1} parent=11 // pred_check
          %p221 = pneg %p147
        $region30: #{tpu_custom_call.1} parent=11 // pred_check_branch
          %223 = sbr.rel (%p221) target = $region32
        $region31: #{tpu_custom_call.1} parent=11 // pred_region
          _
        $region32: #{tpu_custom_call.1} parent=11 // pred_fallthru
          _
        // Predicated region
        $region33: #{tpu_custom_call.1} parent=11 // pred_check
          %p224 = pneg %p168
        $region34: #{tpu_custom_call.1} parent=11 // pred_check_branch
          %226 = sbr.rel (%p224) target = $region36
        $region35: #{tpu_custom_call.1} parent=11 // pred_region
          _
        $region36: #{tpu_custom_call.1} parent=11 // pred_fallthru
          _
      $region12: #{tpu_custom_call.1} parent=5 // pred_fallthru
        _
      %p227 = scmp.lt.s32.totalorder %s16, 2
      // Predicated region
      $region37: #{tpu_custom_call.1} parent=5 // pred_check
        %p228 = pneg %p227
      $region38: #{tpu_custom_call.1} parent=5 // pred_check_branch
        %230 = sbr.rel (%p228) target = $region40
      $region39: #{tpu_custom_call.1} parent=5 // pred_region
        // Predicated region
        $region41: #{tpu_custom_call.1} parent=39 // pred_check
          %p231 = pneg %p36
        $region42: #{tpu_custom_call.1} parent=39 // pred_check_branch
          %233 = sbr.rel (%p231) target = $region44
        $region43: #{tpu_custom_call.1} parent=39 // pred_region
          %p234 = scmp.lt.s32.totalorder %s16, 1
          %s235 = scalar_select %p234, %s16, 1
          %s236 = smul.addr %s235, 8
          %s237 = smul.addr %s236, 8
          %s238 = scalar_lea.vmem %s0, %s237
        $region44: #{tpu_custom_call.1} parent=39 // pred_fallthru
          _
      $region40: #{tpu_custom_call.1} parent=5 // pred_fallthru
        _
      %p239 = scmp.le.s32.totalorder 1, %s16
      %p240 = scmp.lt.s32.totalorder %s16, 3
      %p241 = pnand %p239, %p240
      %p242 = pneg %p241
      // Predicated region
      $region45: #{tpu_custom_call.1} parent=5 // pred_check
        _
      $region46: #{tpu_custom_call.1} parent=5 // pred_check_branch
        %244 = sbr.rel (%p241) target = $region48
      $region47: #{tpu_custom_call.1} parent=5 // pred_region
        %s245 = ssub.s32 %s16, 1
        %p246 = scmp.lt.s32.totalorder %s21, 1
        %s247 = scalar_select %p246, %s21, 1
        %s248 = smul.addr %s247, 8
        %s249 = smul.addr %s248, 8
        %s250 = scalar_lea.vmem %s0, %s249
        %p251 = pneg %p42
        %p252 = pneg %p39
        %p253 = pneg %p63
        %p254 = pneg %p60
        %p255 = pneg %p84
        %p256 = pneg %p81
        %p257 = pneg %p105
        %p258 = pneg %p102
        %p259 = pneg %p126
        %p260 = pneg %p123
        %p261 = pneg %p147
        %p262 = pneg %p144
        %p263 = pneg %p168
        %p264 = pneg %p165
        %p265 = pneg %p194
        %p266 = pneg %p191
        %s267 = sand.u32 %s181, 1
        %s268 = scalar_lea.sflag [#allocation3], %s267
        %s269 = sand.u32 %s181, 1
        %s270 = smul.addr %s269, 64
        %s271 = scalar_lea.vmem [#allocation2], %s270
        %p272 = scmp.lt.s32.totalorder %s21, 1
        %s273 = scalar_select %p272, %s21, 1
        %s274 = smul.addr %s273, 8
        %s275 = smul.addr %s274, 8
        %s276 = scalar_lea.vmem %s0, %s275
        %v277 = vld [vmem:[%s276] sm:$0xff]
        %v278 = vld [vmem:[%s276 + $0x8] sm:$0xff]
        %v279 = vld [vmem:[%s276 + $0x10] sm:$0xff]
        %v280 = vld [vmem:[%s276 + $0x18] sm:$0xff]
        %v281 = vld [vmem:[%s276 + $0x20] sm:$0xff]
        %v282 = vld [vmem:[%s276 + $0x28] sm:$0xff]
        %v283 = vld [vmem:[%s276 + $0x30] sm:$0xff]
        %v284 = vld [vmem:[%s276 + $0x38] sm:$0xff]
        %v285 = vld [vmem:[%s1] sm:$0xff]
        %v286 = vld [vmem:[%s1 + $0x8] sm:$0xff]
        %v287 = vld [vmem:[%s1 + $0x10] sm:$0xff]
        %v288 = vld [vmem:[%s1 + $0x18] sm:$0xff]
        %v289 = vld [vmem:[%s1 + $0x20] sm:$0xff]
        %v290 = vld [vmem:[%s1 + $0x28] sm:$0xff]
        %v291 = vld [vmem:[%s1 + $0x30] sm:$0xff]
        %v292 = vld [vmem:[%s1 + $0x38] sm:$0xff]
        %v293 = vld [vmem:[%s1 + $0x40] sm:$0xff]
        %v294 = vld [vmem:[%s1 + $0x48] sm:$0xff]
        %v295 = vld [vmem:[%s1 + $0x50] sm:$0xff]
        %v296 = vld [vmem:[%s1 + $0x58] sm:$0xff]
        %v297 = vld [vmem:[%s1 + $0x60] sm:$0xff]
        %v298 = vld [vmem:[%s1 + $0x68] sm:$0xff]
        %v299 = vld [vmem:[%s1 + $0x70] sm:$0xff]
        %v300 = vld [vmem:[%s1 + $0x78] sm:$0xff]
        %v301 = vld [vmem:[%s1 + $0x80] sm:$0xff]
        %v302 = vld [vmem:[%s1 + $0x88] sm:$0xff]
        %v303 = vld [vmem:[%s1 + $0x90] sm:$0xff]
        %v304 = vld [vmem:[%s1 + $0x98] sm:$0xff]
        %v305 = vld [vmem:[%s1 + $0xa0] sm:$0xff]
        %v306 = vld [vmem:[%s1 + $0xa8] sm:$0xff]
        %v307 = vld [vmem:[%s1 + $0xb0] sm:$0xff]
        %v308 = vld [vmem:[%s1 + $0xb8] sm:$0xff]
        %v309 = vld [vmem:[%s1 + $0xc0] sm:$0xff]
        %v310 = vld [vmem:[%s1 + $0xc8] sm:$0xff]
        %v311 = vld [vmem:[%s1 + $0xd0] sm:$0xff]
        %v312 = vld [vmem:[%s1 + $0xd8] sm:$0xff]
        %v313 = vld [vmem:[%s1 + $0xe0] sm:$0xff]
        %v314 = vld [vmem:[%s1 + $0xe8] sm:$0xff]
        %v315 = vld [vmem:[%s1 + $0xf0] sm:$0xff]
        %v316 = vld [vmem:[%s1 + $0xf8] sm:$0xff]
        %317 = vmatprep.subr.mxu0 0.0
        %v318 = vand.u32 %v285, 4294901760
        %319 = vmatpush1.msra.mxu0 %v318
        %320 = vmatprep.subr.mxu0 0.0
        %v321 = vand.u32 %v286, 4294901760
        %322 = vmatpush1.msra.mxu0 %v321
        %323 = vmatprep.subr.mxu0 0.0
        %v324 = vand.u32 %v287, 4294901760
        %325 = vmatpush1.msra.mxu0 %v324
        %326 = vmatprep.subr.mxu0 0.0
        %v327 = vand.u32 %v288, 4294901760
        %328 = vmatpush1.msra.mxu0 %v327
        %329 = vmatprep.subr.mxu0 0.0
        %v330 = vand.u32 %v289, 4294901760
        %331 = vmatpush1.msra.mxu0 %v330
        %332 = vmatprep.subr.mxu0 0.0
        %v333 = vand.u32 %v290, 4294901760
        %334 = vmatpush1.msra.mxu0 %v333
        %335 = vmatprep.subr.mxu0 0.0
        %v336 = vand.u32 %v291, 4294901760
        %337 = vmatpush1.msra.mxu0 %v336
        %338 = vmatprep.subr.mxu0 0.0
        %v339 = vand.u32 %v292, 4294901760
        %340 = vmatpush1.msra.mxu0 %v339
        %341 = vmatprep.subr.mxu0 0.0
        %v342 = vand.u32 %v293, 4294901760
        %343 = vmatpush1.msra.mxu0 %v342
        %344 = vmatprep.subr.mxu0 0.0
        %v345 = vand.u32 %v294, 4294901760
        %346 = vmatpush1.msra.mxu0 %v345
        %347 = vmatprep.subr.mxu0 0.0
        %v348 = vand.u32 %v295, 4294901760
        %349 = vmatpush1.msra.mxu0 %v348
        %350 = vmatprep.subr.mxu0 0.0
        %v351 = vand.u32 %v296, 4294901760
        %352 = vmatpush1.msra.mxu0 %v351
        %353 = vmatprep.subr.mxu0 0.0
        %v354 = vand.u32 %v297, 4294901760
        %355 = vmatpush1.msra.mxu0 %v354
        %356 = vmatprep.subr.mxu0 0.0
        %v357 = vand.u32 %v298, 4294901760
        %358 = vmatpush1.msra.mxu0 %v357
        %359 = vmatprep.subr.mxu0 0.0
        %v360 = vand.u32 %v299, 4294901760
        %361 = vmatpush1.msra.mxu0 %v360
        %362 = vmatprep.subr.mxu0 0.0
        %v363 = vand.u32 %v300, 4294901760
        %364 = vmatpush1.msra.mxu0 %v363
        %365 = vmatprep.subr.mxu0 0.0
        %v366 = vand.u32 %v301, 4294901760
        %367 = vmatpush1.msra.mxu0 %v366
        %368 = vmatprep.subr.mxu0 0.0
        %v369 = vand.u32 %v302, 4294901760
        %370 = vmatpush1.msra.mxu0 %v369
        %371 = vmatprep.subr.mxu0 0.0
        %v372 = vand.u32 %v303, 4294901760
        %373 = vmatpush1.msra.mxu0 %v372
        %374 = vmatprep.subr.mxu0 0.0
        %v375 = vand.u32 %v304, 4294901760
        %376 = vmatpush1.msra.mxu0 %v375
        %377 = vmatprep.subr.mxu0 0.0
        %v378 = vand.u32 %v305, 4294901760
        %379 = vmatpush1.msra.mxu0 %v378
        %380 = vmatprep.subr.mxu0 0.0
        %v381 = vand.u32 %v306, 4294901760
        %382 = vmatpush1.msra.mxu0 %v381
        %383 = vmatprep.subr.mxu0 0.0
        %v384 = vand.u32 %v307, 4294901760
        %385 = vmatpush1.msra.mxu0 %v384
        %386 = vmatprep.subr.mxu0 0.0
        %v387 = vand.u32 %v308, 4294901760
        %388 = vmatpush1.msra.mxu0 %v387
        %389 = vmatprep.subr.mxu0 0.0
        %v390 = vand.u32 %v309, 4294901760
        %391 = vmatpush1.msra.mxu0 %v390
        %392 = vmatprep.subr.mxu0 0.0
        %v393 = vand.u32 %v310, 4294901760
        %394 = vmatpush1.msra.mxu0 %v393
        %395 = vmatprep.subr.mxu0 0.0
        %v396 = vand.u32 %v311, 4294901760
        %397 = vmatpush1.msra.mxu0 %v396
        %398 = vmatprep.subr.mxu0 0.0
        %v399 = vand.u32 %v312, 4294901760
        %400 = vmatpush1.msra.mxu0 %v399
        %401 = vmatprep.subr.mxu0 0.0
        %v402 = vand.u32 %v313, 4294901760
        %403 = vmatpush1.msra.mxu0 %v402
        %404 = vmatprep.subr.mxu0 0.0
        %v405 = vand.u32 %v314, 4294901760
        %406 = vmatpush1.msra.mxu0 %v405
        %407 = vmatprep.subr.mxu0 0.0
        %v408 = vand.u32 %v315, 4294901760
        %409 = vmatpush1.msra.mxu0 %v408
        %410 = vmatprep.subr.mxu0 0.0
        %v411 = vand.u32 %v316, 4294901760
        %412 = vmatpush1.msra.mxu0 %v411
        %v413 = vand.u32 %v278, 4294901760
        %v414 = vsub.f32 %v278, %v413
        %v415 = vand.u32 %v414, 4294901760
        %v416 = vsub.f32 %v414, %v415
        %v417 = vand.u32 %v416, 4294901760
        %418 = vmatprep.mubr.f32.mxu0 %v417
        %v419 = vand.u32 %v277, 4294901760
        %v420 = vsub.f32 %v277, %v419
        %v421 = vand.u32 %v420, 4294901760
        %v422 = vsub.f32 %v420, %v421
        %v423 = vand.u32 %v422, 4294901760
        %424 = vmatmul.mubr.f32.gmra.mrb[0].mxu0 %v423
        %v425 = vpop.f32.mrb[0].mxu0
        %v426 = vadd.f32 0.0, %v425
        %v427 = vpop.f32.mrb[0].mxu0
        %v428 = vand.u32 %v280, 4294901760
        %v429 = vsub.f32 %v280, %v428
        %v430 = vand.u32 %v429, 4294901760
        %v431 = vsub.f32 %v429, %v430
        %v432 = vand.u32 %v431, 4294901760
        %433 = vmatprep.mubr.f32.mxu0 %v432
        %v434 = vand.u32 %v279, 4294901760
        %v435 = vsub.f32 %v279, %v434
        %v436 = vand.u32 %v435, 4294901760
        %v437 = vsub.f32 %v435, %v436
        %v438 = vand.u32 %v437, 4294901760
        %439 = vmatmul.mubr.f32.gmra.mrb[0].mxu0 %v438
        %v440 = vpop.f32.mrb[0].mxu0
        %v441 = vadd.f32 0.0, %v440
        %v442 = vpop.f32.mrb[0].mxu0
        %v443 = vand.u32 %v282, 4294901760
        %v444 = vsub.f32 %v282, %v443
        %v445 = vand.u32 %v444, 4294901760
        %v446 = vsub.f32 %v444, %v445
        %v447 = vand.u32 %v446, 4294901760
        %448 = vmatprep.mubr.f32.mxu0 %v447
        %v449 = vand.u32 %v281, 4294901760
        %v450 = vsub.f32 %v281, %v449
        %v451 = vand.u32 %v450, 4294901760
        %v452 = vsub.f32 %v450, %v451
        %v453 = vand.u32 %v452, 4294901760
        %454 = vmatmul.mubr.f32.gmra.mrb[0].mxu0 %v453
        %v455 = vpop.f32.mrb[0].mxu0
        %v456 = vadd.f32 0.0, %v455
        %v457 = vpop.f32.mrb[0].mxu0
        %v458 = vand.u32 %v284, 4294901760
        %v459 = vsub.f32 %v284, %v458
        %v460 = vand.u32 %v459, 4294901760
        %v461 = vsub.f32 %v459, %v460
        %v462 = vand.u32 %v461, 4294901760
        %463 = vmatprep.mubr.f32.mxu0 %v462
        %v464 = vand.u32 %v283, 4294901760
        %v465 = vsub.f32 %v283, %v464
        %v466 = vand.u32 %v465, 4294901760
        %v467 = vsub.f32 %v465, %v466
        %v468 = vand.u32 %v467, 4294901760
        %469 = vmatmul.mubr.f32.gmra.mrb[0].mxu0 %v468
        %v470 = vpop.f32.mrb[0].mxu0
        %v471 = vadd.f32 0.0, %v470
        %v472 = vpop.f32.mrb[0].mxu0
        %473 = vdwg.mxu0
        %474 = vmatprep.subr.mxu0 0.0
        %v475 = vand.u32 %v285, 4294901760
        %v476 = vsub.f32 %v285, %v475
        %v477 = vand.u32 %v476, 4294901760
        %v478 = vsub.f32 %v476, %v477
        %v479 = vand.u32 %v478, 4294901760
        %480 = vmatpush1.msra.mxu0 %v479
        %481 = vmatprep.subr.mxu0 0.0
        %v482 = vand.u32 %v286, 4294901760
        %v483 = vsub.f32 %v286, %v482
        %v484 = vand.u32 %v483, 4294901760
        %v485 = vsub.f32 %v483, %v484
        %v486 = vand.u32 %v485, 4294901760
        %487 = vmatpush1.msra.mxu0 %v486
        %488 = vmatprep.subr.mxu0 0.0
        %v489 = vand.u32 %v287, 4294901760
        %v490 = vsub.f32 %v287, %v489
        %v491 = vand.u32 %v490, 4294901760
        %v492 = vsub.f32 %v490, %v491
        %v493 = vand.u32 %v492, 4294901760
        %494 = vmatpush1.msra.mxu0 %v493
        %495 = vmatprep.subr.mxu0 0.0
        %v496 = vand.u32 %v288, 4294901760
        %v497 = vsub.f32 %v288, %v496
        %v498 = vand.u32 %v497, 4294901760
        %v499 = vsub.f32 %v497, %v498
        %v500 = vand.u32 %v499, 4294901760
        %501 = vmatpush1.msra.mxu0 %v500
        %502 = vmatprep.subr.mxu0 0.0
        %v503 = vand.u32 %v289, 4294901760
        %v504 = vsub.f32 %v289, %v503
        %v505 = vand.u32 %v504, 4294901760
        %v506 = vsub.f32 %v504, %v505
        %v507 = vand.u32 %v506, 4294901760
        %508 = vmatpush1.msra.mxu0 %v507
        %509 = vmatprep.subr.mxu0 0.0
        %v510 = vand.u32 %v290, 4294901760
        %v511 = vsub.f32 %v290, %v510
        %v512 = vand.u32 %v511, 4294901760
        %v513 = vsub.f32 %v511, %v512
        %v514 = vand.u32 %v513, 4294901760
        %515 = vmatpush1.msra.mxu0 %v514
        %516 = vmatprep.subr.mxu0 0.0
        %v517 = vand.u32 %v291, 4294901760
        %v518 = vsub.f32 %v291, %v517
        %v519 = vand.u32 %v518, 4294901760
        %v520 = vsub.f32 %v518, %v519
        %v521 = vand.u32 %v520, 4294901760
        %522 = vmatpush1.msra.mxu0 %v521
        %523 = vmatprep.subr.mxu0 0.0
        %v524 = vand.u32 %v292, 4294901760
        %v525 = vsub.f32 %v292, %v524
        %v526 = vand.u32 %v525, 4294901760
        %v527 = vsub.f32 %v525, %v526
        %v528 = vand.u32 %v527, 4294901760
        %529 = vmatpush1.msra.mxu0 %v528
        %530 = vmatprep.subr.mxu0 0.0
        %v531 = vand.u32 %v293, 4294901760
        %v532 = vsub.f32 %v293, %v531
        %v533 = vand.u32 %v532, 4294901760
        %v534 = vsub.f32 %v532, %v533
        %v535 = vand.u32 %v534, 4294901760
        %536 = vmatpush1.msra.mxu0 %v535
        %537 = vmatprep.subr.mxu0 0.0
        %v538 = vand.u32 %v294, 4294901760
        %v539 = vsub.f32 %v294, %v538
        %v540 = vand.u32 %v539, 4294901760
        %v541 = vsub.f32 %v539, %v540
        %v542 = vand.u32 %v541, 4294901760
        %543 = vmatpush1.msra.mxu0 %v542
        %544 = vmatprep.subr.mxu0 0.0
        %v545 = vand.u32 %v295, 4294901760
        %v546 = vsub.f32 %v295, %v545
        %v547 = vand.u32 %v546, 4294901760
        %v548 = vsub.f32 %v546, %v547
        %v549 = vand.u32 %v548, 4294901760
        %550 = vmatpush1.msra.mxu0 %v549
        %551 = vmatprep.subr.mxu0 0.0
        %v552 = vand.u32 %v296, 4294901760
        %v553 = vsub.f32 %v296, %v552
        %v554 = vand.u32 %v553, 4294901760
        %v555 = vsub.f32 %v553, %v554
        %v556 = vand.u32 %v555, 4294901760
        %557 = vmatpush1.msra.mxu0 %v556
        %558 = vmatprep.subr.mxu0 0.0
        %v559 = vand.u32 %v297, 4294901760
        %v560 = vsub.f32 %v297, %v559
        %v561 = vand.u32 %v560, 4294901760
        %v562 = vsub.f32 %v560, %v561
        %v563 = vand.u32 %v562, 4294901760
        %564 = vmatpush1.msra.mxu0 %v563
        %565 = vmatprep.subr.mxu0 0.0
        %v566 = vand.u32 %v298, 4294901760
        %v567 = vsub.f32 %v298, %v566
        %v568 = vand.u32 %v567, 4294901760
        %v569 = vsub.f32 %v567, %v568
        %v570 = vand.u32 %v569, 4294901760
        %571 = vmatpush1.msra.mxu0 %v570
        %572 = vmatprep.subr.mxu0 0.0
        %v573 = vand.u32 %v299, 4294901760
        %v574 = vsub.f32 %v299, %v573
        %v575 = vand.u32 %v574, 4294901760
        %v576 = vsub.f32 %v574, %v575
        %v577 = vand.u32 %v576, 4294901760
        %578 = vmatpush1.msra.mxu0 %v577
        %579 = vmatprep.subr.mxu0 0.0
        %v580 = vand.u32 %v300, 4294901760
        %v581 = vsub.f32 %v300, %v580
        %v582 = vand.u32 %v581, 4294901760
        %v583 = vsub.f32 %v581, %v582
        %v584 = vand.u32 %v583, 4294901760
        %585 = vmatpush1.msra.mxu0 %v584
        %586 = vmatprep.subr.mxu0 0.0
        %v587 = vand.u32 %v301, 4294901760
        %v588 = vsub.f32 %v301, %v587
        %v589 = vand.u32 %v588, 4294901760
        %v590 = vsub.f32 %v588, %v589
        %v591 = vand.u32 %v590, 4294901760
        %592 = vmatpush1.msra.mxu0 %v591
        %593 = vmatprep.subr.mxu0 0.0
        %v594 = vand.u32 %v302, 4294901760
        %v595 = vsub.f32 %v302, %v594
        %v596 = vand.u32 %v595, 4294901760
        %v597 = vsub.f32 %v595, %v596
        %v598 = vand.u32 %v597, 4294901760
        %599 = vmatpush1.msra.mxu0 %v598
        %600 = vmatprep.subr.mxu0 0.0
        %v601 = vand.u32 %v303, 4294901760
        %v602 = vsub.f32 %v303, %v601
        %v603 = vand.u32 %v602, 4294901760
        %v604 = vsub.f32 %v602, %v603
        %v605 = vand.u32 %v604, 4294901760
        %606 = vmatpush1.msra.mxu0 %v605
        %607 = vmatprep.subr.mxu0 0.0
        %v608 = vand.u32 %v304, 4294901760
        %v609 = vsub.f32 %v304, %v608
        %v610 = vand.u32 %v609, 4294901760
        %v611 = vsub.f32 %v609, %v610
        %v612 = vand.u32 %v611, 4294901760
        %613 = vmatpush1.msra.mxu0 %v612
        %614 = vmatprep.subr.mxu0 0.0
        %v615 = vand.u32 %v305, 4294901760
        %v616 = vsub.f32 %v305, %v615
        %v617 = vand.u32 %v616, 4294901760
        %v618 = vsub.f32 %v616, %v617
        %v619 = vand.u32 %v618, 4294901760
        %620 = vmatpush1.msra.mxu0 %v619
        %621 = vmatprep.subr.mxu0 0.0
        %v622 = vand.u32 %v306, 4294901760
        %v623 = vsub.f32 %v306, %v622
        %v624 = vand.u32 %v623, 4294901760
        %v625 = vsub.f32 %v623, %v624
        %v626 = vand.u32 %v625, 4294901760
        %627 = vmatpush1.msra.mxu0 %v626
        %628 = vmatprep.subr.mxu0 0.0
        %v629 = vand.u32 %v307, 4294901760
        %v630 = vsub.f32 %v307, %v629
        %v631 = vand.u32 %v630, 4294901760
        %v632 = vsub.f32 %v630, %v631
        %v633 = vand.u32 %v632, 4294901760
        %634 = vmatpush1.msra.mxu0 %v633
        %635 = vmatprep.subr.mxu0 0.0
        %v636 = vand.u32 %v308, 4294901760
        %v637 = vsub.f32 %v308, %v636
        %v638 = vand.u32 %v637, 4294901760
        %v639 = vsub.f32 %v637, %v638
        %v640 = vand.u32 %v639, 4294901760
        %641 = vmatpush1.msra.mxu0 %v640
        %642 = vmatprep.subr.mxu0 0.0
        %v643 = vand.u32 %v309, 4294901760
        %v644 = vsub.f32 %v309, %v643
        %v645 = vand.u32 %v644, 4294901760
        %v646 = vsub.f32 %v644, %v645
        %v647 = vand.u32 %v646, 4294901760
        %648 = vmatpush1.msra.mxu0 %v647
        %649 = vmatprep.subr.mxu0 0.0
        %v650 = vand.u32 %v310, 4294901760
        %v651 = vsub.f32 %v310, %v650
        %v652 = vand.u32 %v651, 4294901760
        %v653 = vsub.f32 %v651, %v652
        %v654 = vand.u32 %v653, 4294901760
        %655 = vmatpush1.msra.mxu0 %v654
        %656 = vmatprep.subr.mxu0 0.0
        %v657 = vand.u32 %v311, 4294901760
        %v658 = vsub.f32 %v311, %v657
        %v659 = vand.u32 %v658, 4294901760
        %v660 = vsub.f32 %v658, %v659
        %v661 = vand.u32 %v660, 4294901760
        %662 = vmatpush1.msra.mxu0 %v661
        %663 = vmatprep.subr.mxu0 0.0
        %v664 = vand.u32 %v312, 4294901760
        %v665 = vsub.f32 %v312, %v664
        %v666 = vand.u32 %v665, 4294901760
        %v667 = vsub.f32 %v665, %v666
        %v668 = vand.u32 %v667, 4294901760
        %669 = vmatpush1.msra.mxu0 %v668
        %670 = vmatprep.subr.mxu0 0.0
        %v671 = vand.u32 %v313, 4294901760
        %v672 = vsub.f32 %v313, %v671
        %v673 = vand.u32 %v672, 4294901760
        %v674 = vsub.f32 %v672, %v673
        %v675 = vand.u32 %v674, 4294901760
        %676 = vmatpush1.msra.mxu0 %v675
        %677 = vmatprep.subr.mxu0 0.0
        %v678 = vand.u32 %v314, 4294901760
        %v679 = vsub.f32 %v314, %v678
        %v680 = vand.u32 %v679, 4294901760
        %v681 = vsub.f32 %v679, %v680
        %v682 = vand.u32 %v681, 4294901760
        %683 = vmatpush1.msra.mxu0 %v682
        %684 = vmatprep.subr.mxu0 0.0
        %v685 = vand.u32 %v315, 4294901760
        %v686 = vsub.f32 %v315, %v685
        %v687 = vand.u32 %v686, 4294901760
        %v688 = vsub.f32 %v686, %v687
        %v689 = vand.u32 %v688, 4294901760
        %690 = vmatpush1.msra.mxu0 %v689
        %691 = vmatprep.subr.mxu0 0.0
        %v692 = vand.u32 %v316, 4294901760
        %v693 = vsub.f32 %v316, %v692
        %v694 = vand.u32 %v693, 4294901760
        %v695 = vsub.f32 %v693, %v694
        %v696 = vand.u32 %v695, 4294901760
        %697 = vmatpush1.msra.mxu0 %v696
        %v698 = vand.u32 %v278, 4294901760
        %699 = vmatprep.mubr.f32.mxu0 %v698
        %v700 = vand.u32 %v277, 4294901760
        %701 = vmatmul.mubr.f32.gmra.mrb[0].mxu0 %v700
        %v702 = vpop.f32.mrb[0].mxu0
        %v703 = vadd.f32 %v426, %v702
        %v704 = vpop.f32.mrb[0].mxu0
        %v705 = vand.u32 %v280, 4294901760
        %706 = vmatprep.mubr.f32.mxu0 %v705
        %v707 = vand.u32 %v279, 4294901760
        %708 = vmatmul.mubr.f32.gmra.mrb[0].mxu0 %v707
        %v709 = vpop.f32.mrb[0].mxu0
        %v710 = vadd.f32 %v441, %v709
        %v711 = vpop.f32.mrb[0].mxu0
        %v712 = vand.u32 %v282, 4294901760
        %713 = vmatprep.mubr.f32.mxu0 %v712
        %v714 = vand.u32 %v281, 4294901760
        %715 = vmatmul.mubr.f32.gmra.mrb[0].mxu0 %v714
        %v716 = vpop.f32.mrb[0].mxu0
        %v717 = vadd.f32 %v456, %v716
        %v718 = vpop.f32.mrb[0].mxu0
        %v719 = vand.u32 %v284, 4294901760
        %720 = vmatprep.mubr.f32.mxu0 %v719
        %v721 = vand.u32 %v283, 4294901760
        %722 = vmatmul.mubr.f32.gmra.mrb[0].mxu0 %v721
        %v723 = vpop.f32.mrb[0].mxu0
        %v724 = vadd.f32 %v471, %v723
        %v725 = vpop.f32.mrb[0].mxu0
        %726 = vdwg.mxu0
        %727 = vmatprep.subr.mxu0 0.0
        %v728 = vand.u32 %v285, 4294901760
        %v729 = vsub.f32 %v285, %v728
        %730 = vmatpush1.msra.mxu0 %v729
        %731 = vmatprep.subr.mxu0 0.0
        %v732 = vand.u32 %v286, 4294901760
        %v733 = vsub.f32 %v286, %v732
        %734 = vmatpush1.msra.mxu0 %v733
        %735 = vmatprep.subr.mxu0 0.0
        %v736 = vand.u32 %v287, 4294901760
        %v737 = vsub.f32 %v287, %v736
        %738 = vmatpush1.msra.mxu0 %v737
        %739 = vmatprep.subr.mxu0 0.0
        %v740 = vand.u32 %v288, 4294901760
        %v741 = vsub.f32 %v288, %v740
        %742 = vmatpush1.msra.mxu0 %v741
        %743 = vmatprep.subr.mxu0 0.0
        %v744 = vand.u32 %v289, 4294901760
        %v745 = vsub.f32 %v289, %v744
        %746 = vmatpush1.msra.mxu0 %v745
        %747 = vmatprep.subr.mxu0 0.0
        %v748 = vand.u32 %v290, 4294901760
        %v749 = vsub.f32 %v290, %v748
        %750 = vmatpush1.msra.mxu0 %v749
        %751 = vmatprep.subr.mxu0 0.0
        %v752 = vand.u32 %v291, 4294901760
        %v753 = vsub.f32 %v291, %v752
        %754 = vmatpush1.msra.mxu0 %v753
        %755 = vmatprep.subr.mxu0 0.0
        %v756 = vand.u32 %v292, 4294901760
        %v757 = vsub.f32 %v292, %v756
        %758 = vmatpush1.msra.mxu0 %v757
        %759 = vmatprep.subr.mxu0 0.0
        %v760 = vand.u32 %v293, 4294901760
        %v761 = vsub.f32 %v293, %v760
        %762 = vmatpush1.msra.mxu0 %v761
        %763 = vmatprep.subr.mxu0 0.0
        %v764 = vand.u32 %v294, 4294901760
        %v765 = vsub.f32 %v294, %v764
        %766 = vmatpush1.msra.mxu0 %v765
        %767 = vmatprep.subr.mxu0 0.0
        %v768 = vand.u32 %v295, 4294901760
        %v769 = vsub.f32 %v295, %v768
        %770 = vmatpush1.msra.mxu0 %v769
        %771 = vmatprep.subr.mxu0 0.0
        %v772 = vand.u32 %v296, 4294901760
        %v773 = vsub.f32 %v296, %v772
        %774 = vmatpush1.msra.mxu0 %v773
        %775 = vmatprep.subr.mxu0 0.0
        %v776 = vand.u32 %v297, 4294901760
        %v777 = vsub.f32 %v297, %v776
        %778 = vmatpush1.msra.mxu0 %v777
        %779 = vmatprep.subr.mxu0 0.0
        %v780 = vand.u32 %v298, 4294901760
        %v781 = vsub.f32 %v298, %v780
        %782 = vmatpush1.msra.mxu0 %v781
        %783 = vmatprep.subr.mxu0 0.0
        %v784 = vand.u32 %v299, 4294901760
        %v785 = vsub.f32 %v299, %v784
        %786 = vmatpush1.msra.mxu0 %v785
        %787 = vmatprep.subr.mxu0 0.0
        %v788 = vand.u32 %v300, 4294901760
        %v789 = vsub.f32 %v300, %v788
        %790 = vmatpush1.msra.mxu0 %v789
        %791 = vmatprep.subr.mxu0 0.0
        %v792 = vand.u32 %v301, 4294901760
        %v793 = vsub.f32 %v301, %v792
        %794 = vmatpush1.msra.mxu0 %v793
        %795 = vmatprep.subr.mxu0 0.0
        %v796 = vand.u32 %v302, 4294901760
        %v797 = vsub.f32 %v302, %v796
        %798 = vmatpush1.msra.mxu0 %v797
        %799 = vmatprep.subr.mxu0 0.0
        %v800 = vand.u32 %v303, 4294901760
        %v801 = vsub.f32 %v303, %v800
        %802 = vmatpush1.msra.mxu0 %v801
        %803 = vmatprep.subr.mxu0 0.0
        %v804 = vand.u32 %v304, 4294901760
        %v805 = vsub.f32 %v304, %v804
        %806 = vmatpush1.msra.mxu0 %v805
        %807 = vmatprep.subr.mxu0 0.0
        %v808 = vand.u32 %v305, 4294901760
        %v809 = vsub.f32 %v305, %v808
        %810 = vmatpush1.msra.mxu0 %v809
        %811 = vmatprep.subr.mxu0 0.0
        %v812 = vand.u32 %v306, 4294901760
        %v813 = vsub.f32 %v306, %v812
        %814 = vmatpush1.msra.mxu0 %v813
        %815 = vmatprep.subr.mxu0 0.0
        %v816 = vand.u32 %v307, 4294901760
        %v817 = vsub.f32 %v307, %v816
        %818 = vmatpush1.msra.mxu0 %v817
        %819 = vmatprep.subr.mxu0 0.0
        %v820 = vand.u32 %v308, 4294901760
        %v821 = vsub.f32 %v308, %v820
        %822 = vmatpush1.msra.mxu0 %v821
        %823 = vmatprep.subr.mxu0 0.0
        %v824 = vand.u32 %v309, 4294901760
        %v825 = vsub.f32 %v309, %v824
        %826 = vmatpush1.msra.mxu0 %v825
        %827 = vmatprep.subr.mxu0 0.0
        %v828 = vand.u32 %v310, 4294901760
        %v829 = vsub.f32 %v310, %v828
        %830 = vmatpush1.msra.mxu0 %v829
        %831 = vmatprep.subr.mxu0 0.0
        %v832 = vand.u32 %v311, 4294901760
        %v833 = vsub.f32 %v311, %v832
        %834 = vmatpush1.msra.mxu0 %v833
        %835 = vmatprep.subr.mxu0 0.0
        %v836 = vand.u32 %v312, 4294901760
        %v837 = vsub.f32 %v312, %v836
        %838 = vmatpush1.msra.mxu0 %v837
        %839 = vmatprep.subr.mxu0 0.0
        %v840 = vand.u32 %v313, 4294901760
        %v841 = vsub.f32 %v313, %v840
        %842 = vmatpush1.msra.mxu0 %v841
        %843 = vmatprep.subr.mxu0 0.0
        %v844 = vand.u32 %v314, 4294901760
        %v845 = vsub.f32 %v314, %v844
        %846 = vmatpush1.msra.mxu0 %v845
        %847 = vmatprep.subr.mxu0 0.0
        %v848 = vand.u32 %v315, 4294901760
        %v849 = vsub.f32 %v315, %v848
        %850 = vmatpush1.msra.mxu0 %v849
        %851 = vmatprep.subr.mxu0 0.0
        %v852 = vand.u32 %v316, 4294901760
        %v853 = vsub.f32 %v316, %v852
        %854 = vmatpush1.msra.mxu0 %v853
        %v855 = vand.u32 %v278, 4294901760
        %v856 = vsub.f32 %v278, %v855
        %857 = vmatprep.mubr.f32.mxu0 %v856
        %v858 = vand.u32 %v277, 4294901760
        %v859 = vsub.f32 %v277, %v858
        %860 = vmatmul.mubr.f32.gmra.mrb[0].mxu0 %v859
        %v861 = vpop.f32.mrb[0].mxu0
        %v862 = vadd.f32 %v703, %v861
        %v863 = vpop.f32.mrb[0].mxu0
        %v864 = vand.u32 %v280, 4294901760
        %v865 = vsub.f32 %v280, %v864
        %866 = vmatprep.mubr.f32.mxu0 %v865
        %v867 = vand.u32 %v279, 4294901760
        %v868 = vsub.f32 %v279, %v867
        %869 = vmatmul.mubr.f32.gmra.mrb[0].mxu0 %v868
        %v870 = vpop.f32.mrb[0].mxu0
        %v871 = vadd.f32 %v710, %v870
        %v872 = vpop.f32.mrb[0].mxu0
        %v873 = vand.u32 %v282, 4294901760
        %v874 = vsub.f32 %v282, %v873
        %875 = vmatprep.mubr.f32.mxu0 %v874
        %v876 = vand.u32 %v281, 4294901760
        %v877 = vsub.f32 %v281, %v876
        %878 = vmatmul.mubr.f32.gmra.mrb[0].mxu0 %v877
        %v879 = vpop.f32.mrb[0].mxu0
        %v880 = vadd.f32 %v717, %v879
        %v881 = vpop.f32.mrb[0].mxu0
        %v882 = vand.u32 %v284, 4294901760
        %v883 = vsub.f32 %v284, %v882
        %884 = vmatprep.mubr.f32.mxu0 %v883
        %v885 = vand.u32 %v283, 4294901760
        %v886 = vsub.f32 %v283, %v885
        %887 = vmatmul.mubr.f32.gmra.mrb[0].mxu0 %v886
        %v888 = vpop.f32.mrb[0].mxu0
        %v889 = vadd.f32 %v724, %v888
        %v890 = vpop.f32.mrb[0].mxu0
        %891 = vdwg.mxu0
        %892 = vmatprep.subr.mxu0 0.0
        %v893 = vand.u32 %v285, 4294901760
        %894 = vmatpush1.msra.mxu0 %v893
        %895 = vmatprep.subr.mxu0 0.0
        %v896 = vand.u32 %v286, 4294901760
        %897 = vmatpush1.msra.mxu0 %v896
        %898 = vmatprep.subr.mxu0 0.0
        %v899 = vand.u32 %v287, 4294901760
        %900 = vmatpush1.msra.mxu0 %v899
        %901 = vmatprep.subr.mxu0 0.0
        %v902 = vand.u32 %v288, 4294901760
        %903 = vmatpush1.msra.mxu0 %v902
        %904 = vmatprep.subr.mxu0 0.0
        %v905 = vand.u32 %v289, 4294901760
        %906 = vmatpush1.msra.mxu0 %v905
        %907 = vmatprep.subr.mxu0 0.0
        %v908 = vand.u32 %v290, 4294901760
        %909 = vmatpush1.msra.mxu0 %v908
        %910 = vmatprep.subr.mxu0 0.0
        %v911 = vand.u32 %v291, 4294901760
        %912 = vmatpush1.msra.mxu0 %v911
        %913 = vmatprep.subr.mxu0 0.0
        %v914 = vand.u32 %v292, 4294901760
        %915 = vmatpush1.msra.mxu0 %v914
        %916 = vmatprep.subr.mxu0 0.0
        %v917 = vand.u32 %v293, 4294901760
        %918 = vmatpush1.msra.mxu0 %v917
        %919 = vmatprep.subr.mxu0 0.0
        %v920 = vand.u32 %v294, 4294901760
        %921 = vmatpush1.msra.mxu0 %v920
        %922 = vmatprep.subr.mxu0 0.0
        %v923 = vand.u32 %v295, 4294901760
        %924 = vmatpush1.msra.mxu0 %v923
        %925 = vmatprep.subr.mxu0 0.0
        %v926 = vand.u32 %v296, 4294901760
        %927 = vmatpush1.msra.mxu0 %v926
        %928 = vmatprep.subr.mxu0 0.0
        %v929 = vand.u32 %v297, 4294901760
        %930 = vmatpush1.msra.mxu0 %v929
        %931 = vmatprep.subr.mxu0 0.0
        %v932 = vand.u32 %v298, 4294901760
        %933 = vmatpush1.msra.mxu0 %v932
        %934 = vmatprep.subr.mxu0 0.0
        %v935 = vand.u32 %v299, 4294901760
        %936 = vmatpush1.msra.mxu0 %v935
        %937 = vmatprep.subr.mxu0 0.0
        %v938 = vand.u32 %v300, 4294901760
        %939 = vmatpush1.msra.mxu0 %v938
        %940 = vmatprep.subr.mxu0 0.0
        %v941 = vand.u32 %v301, 4294901760
        %942 = vmatpush1.msra.mxu0 %v941
        %943 = vmatprep.subr.mxu0 0.0
        %v944 = vand.u32 %v302, 4294901760
        %945 = vmatpush1.msra.mxu0 %v944
        %946 = vmatprep.subr.mxu0 0.0
        %v947 = vand.u32 %v303, 4294901760
        %948 = vmatpush1.msra.mxu0 %v947
        %949 = vmatprep.subr.mxu0 0.0
        %v950 = vand.u32 %v304, 4294901760
        %951 = vmatpush1.msra.mxu0 %v950
        %952 = vmatprep.subr.mxu0 0.0
        %v953 = vand.u32 %v305, 4294901760
        %954 = vmatpush1.msra.mxu0 %v953
        %955 = vmatprep.subr.mxu0 0.0
        %v956 = vand.u32 %v306, 4294901760
        %957 = vmatpush1.msra.mxu0 %v956
        %958 = vmatprep.subr.mxu0 0.0
        %v959 = vand.u32 %v307, 4294901760
        %960 = vmatpush1.msra.mxu0 %v959
        %961 = vmatprep.subr.mxu0 0.0
        %v962 = vand.u32 %v308, 4294901760
        %963 = vmatpush1.msra.mxu0 %v962
        %964 = vmatprep.subr.mxu0 0.0
        %v965 = vand.u32 %v309, 4294901760
        %966 = vmatpush1.msra.mxu0 %v965
        %967 = vmatprep.subr.mxu0 0.0
        %v968 = vand.u32 %v310, 4294901760
        %969 = vmatpush1.msra.mxu0 %v968
        %970 = vmatprep.subr.mxu0 0.0
        %v971 = vand.u32 %v311, 4294901760
        %972 = vmatpush1.msra.mxu0 %v971
        %973 = vmatprep.subr.mxu0 0.0
        %v974 = vand.u32 %v312, 4294901760
        %975 = vmatpush1.msra.mxu0 %v974
        %976 = vmatprep.subr.mxu0 0.0
        %v977 = vand.u32 %v313, 4294901760
        %978 = vmatpush1.msra.mxu0 %v977
        %979 = vmatprep.subr.mxu0 0.0
        %v980 = vand.u32 %v314, 4294901760
        %981 = vmatpush1.msra.mxu0 %v980
        %982 = vmatprep.subr.mxu0 0.0
        %v983 = vand.u32 %v315, 4294901760
        %984 = vmatpush1.msra.mxu0 %v983
        %985 = vmatprep.subr.mxu0 0.0
        %v986 = vand.u32 %v316, 4294901760
        %987 = vmatpush1.msra.mxu0 %v986
        %v988 = vand.u32 %v278, 4294901760
        %v989 = vsub.f32 %v278, %v988
        %v990 = vand.u32 %v989, 4294901760
        %991 = vmatprep.mubr.f32.mxu0 %v990
        %v992 = vand.u32 %v277, 4294901760
        %v993 = vsub.f32 %v277, %v992
        %v994 = vand.u32 %v993, 4294901760
        %995 = vmatmul.mubr.f32.gmra.mrb[0].mxu0 %v994
        %v996 = vpop.f32.mrb[0].mxu0
        %v997 = vadd.f32 %v862, %v996
        %v998 = vpop.f32.mrb[0].mxu0
        %v999 = vand.u32 %v280, 4294901760
        %v1000 = vsub.f32 %v280, %v999
        %v1001 = vand.u32 %v1000, 4294901760
        %1002 = vmatprep.mubr.f32.mxu0 %v1001
        %v1003 = vand.u32 %v279, 4294901760
        %v1004 = vsub.f32 %v279, %v1003
        %v1005 = vand.u32 %v1004, 4294901760
        %1006 = vmatmul.mubr.f32.gmra.mrb[0].mxu0 %v1005
        %v1007 = vpop.f32.mrb[0].mxu0
        %v1008 = vadd.f32 %v871, %v1007
        %v1009 = vpop.f32.mrb[0].mxu0
        %v1010 = vand.u32 %v282, 4294901760
        %v1011 = vsub.f32 %v282, %v1010
        %v1012 = vand.u32 %v1011, 4294901760
        %1013 = vmatprep.mubr.f32.mxu0 %v1012
        %v1014 = vand.u32 %v281, 4294901760
        %v1015 = vsub.f32 %v281, %v1014
        %v1016 = vand.u32 %v1015, 4294901760
        %1017 = vmatmul.mubr.f32.gmra.mrb[0].mxu0 %v1016
        %v1018 = vpop.f32.mrb[0].mxu0
        %v1019 = vadd.f32 %v880, %v1018
        %v1020 = vpop.f32.mrb[0].mxu0
        %v1021 = vand.u32 %v284, 4294901760
        %v1022 = vsub.f32 %v284, %v1021
        %v1023 = vand.u32 %v1022, 4294901760
        %1024 = vmatprep.mubr.f32.mxu0 %v1023
        %v1025 = vand.u32 %v283, 4294901760
        %v1026 = vsub.f32 %v283, %v1025
        %v1027 = vand.u32 %v1026, 4294901760
        %1028 = vmatmul.mubr.f32.gmra.mrb[0].mxu0 %v1027
        %v1029 = vpop.f32.mrb[0].mxu0
        %v1030 = vadd.f32 %v889, %v1029
        %v1031 = vpop.f32.mrb[0].mxu0
        %1032 = vdwg.mxu0
        %1033 = vmatprep.subr.mxu0 0.0
        %v1034 = vand.u32 %v285, 4294901760
        %v1035 = vsub.f32 %v285, %v1034
        %v1036 = vand.u32 %v1035, 4294901760
        %1037 = vmatpush1.msra.mxu0 %v1036
        %1038 = vmatprep.subr.mxu0 0.0
        %v1039 = vand.u32 %v286, 4294901760
        %v1040 = vsub.f32 %v286, %v1039
        %v1041 = vand.u32 %v1040, 4294901760
        %1042 = vmatpush1.msra.mxu0 %v1041
        %1043 = vmatprep.subr.mxu0 0.0
        %v1044 = vand.u32 %v287, 4294901760
        %v1045 = vsub.f32 %v287, %v1044
        %v1046 = vand.u32 %v1045, 4294901760
        %1047 = vmatpush1.msra.mxu0 %v1046
        %1048 = vmatprep.subr.mxu0 0.0
        %v1049 = vand.u32 %v288, 4294901760
        %v1050 = vsub.f32 %v288, %v1049
        %v1051 = vand.u32 %v1050, 4294901760
        %1052 = vmatpush1.msra.mxu0 %v1051
        %1053 = vmatprep.subr.mxu0 0.0
        %v1054 = vand.u32 %v289, 4294901760
        %v1055 = vsub.f32 %v289, %v1054
        %v1056 = vand.u32 %v1055, 4294901760
        %1057 = vmatpush1.msra.mxu0 %v1056
        %1058 = vmatprep.subr.mxu0 0.0
        %v1059 = vand.u32 %v290, 4294901760
        %v1060 = vsub.f32 %v290, %v1059
        %v1061 = vand.u32 %v1060, 4294901760
        %1062 = vmatpush1.msra.mxu0 %v1061
        %1063 = vmatprep.subr.mxu0 0.0
        %v1064 = vand.u32 %v291, 4294901760
        %v1065 = vsub.f32 %v291, %v1064
        %v1066 = vand.u32 %v1065, 4294901760
        %1067 = vmatpush1.msra.mxu0 %v1066
        %1068 = vmatprep.subr.mxu0 0.0
        %v1069 = vand.u32 %v292, 4294901760
        %v1070 = vsub.f32 %v292, %v1069
        %v1071 = vand.u32 %v1070, 4294901760
        %1072 = vmatpush1.msra.mxu0 %v1071
        %1073 = vmatprep.subr.mxu0 0.0
        %v1074 = vand.u32 %v293, 4294901760
        %v1075 = vsub.f32 %v293, %v1074
        %v1076 = vand.u32 %v1075, 4294901760
        %1077 = vmatpush1.msra.mxu0 %v1076
        %1078 = vmatprep.subr.mxu0 0.0
        %v1079 = vand.u32 %v294, 4294901760
        %v1080 = vsub.f32 %v294, %v1079
        %v1081 = vand.u32 %v1080, 4294901760
        %1082 = vmatpush1.msra.mxu0 %v1081
        %1083 = vmatprep.subr.mxu0 0.0
        %v1084 = vand.u32 %v295, 4294901760
        %v1085 = vsub.f32 %v295, %v1084
        %v1086 = vand.u32 %v1085, 4294901760
        %1087 = vmatpush1.msra.mxu0 %v1086
        %1088 = vmatprep.subr.mxu0 0.0
        %v1089 = vand.u32 %v296, 4294901760
        %v1090 = vsub.f32 %v296, %v1089
        %v1091 = vand.u32 %v1090, 4294901760
        %1092 = vmatpush1.msra.mxu0 %v1091
        %1093 = vmatprep.subr.mxu0 0.0
        %v1094 = vand.u32 %v297, 4294901760
        %v1095 = vsub.f32 %v297, %v1094
        %v1096 = vand.u32 %v1095, 4294901760
        %1097 = vmatpush1.msra.mxu0 %v1096
        %1098 = vmatprep.subr.mxu0 0.0
        %v1099 = vand.u32 %v298, 4294901760
        %v1100 = vsub.f32 %v298, %v1099
        %v1101 = vand.u32 %v1100, 4294901760
        %1102 = vmatpush1.msra.mxu0 %v1101
        %1103 = vmatprep.subr.mxu0 0.0
        %v1104 = vand.u32 %v299, 4294901760
        %v1105 = vsub.f32 %v299, %v1104
        %v1106 = vand.u32 %v1105, 4294901760
        %1107 = vmatpush1.msra.mxu0 %v1106
        %1108 = vmatprep.subr.mxu0 0.0
        %v1109 = vand.u32 %v300, 4294901760
        %v1110 = vsub.f32 %v300, %v1109
        %v1111 = vand.u32 %v1110, 4294901760
        %1112 = vmatpush1.msra.mxu0 %v1111
        %1113 = vmatprep.subr.mxu0 0.0
        %v1114 = vand.u32 %v301, 4294901760
        %v1115 = vsub.f32 %v301, %v1114
        %v1116 = vand.u32 %v1115, 4294901760
        %1117 = vmatpush1.msra.mxu0 %v1116
        %1118 = vmatprep.subr.mxu0 0.0
        %v1119 = vand.u32 %v302, 4294901760
        %v1120 = vsub.f32 %v302, %v1119
        %v1121 = vand.u32 %v1120, 4294901760
        %1122 = vmatpush1.msra.mxu0 %v1121
        %1123 = vmatprep.subr.mxu0 0.0
        %v1124 = vand.u32 %v303, 4294901760
        %v1125 = vsub.f32 %v303, %v1124
        %v1126 = vand.u32 %v1125, 4294901760
        %1127 = vmatpush1.msra.mxu0 %v1126
        %1128 = vmatprep.subr.mxu0 0.0
        %v1129 = vand.u32 %v304, 4294901760
        %v1130 = vsub.f32 %v304, %v1129
        %v1131 = vand.u32 %v1130, 4294901760
        %1132 = vmatpush1.msra.mxu0 %v1131
        %1133 = vmatprep.subr.mxu0 0.0
        %v1134 = vand.u32 %v305, 4294901760
        %v1135 = vsub.f32 %v305, %v1134
        %v1136 = vand.u32 %v1135, 4294901760
        %1137 = vmatpush1.msra.mxu0 %v1136
        %1138 = vmatprep.subr.mxu0 0.0
        %v1139 = vand.u32 %v306, 4294901760
        %v1140 = vsub.f32 %v306, %v1139
        %v1141 = vand.u32 %v1140, 4294901760
        %1142 = vmatpush1.msra.mxu0 %v1141
        %1143 = vmatprep.subr.mxu0 0.0
        %v1144 = vand.u32 %v307, 4294901760
        %v1145 = vsub.f32 %v307, %v1144
        %v1146 = vand.u32 %v1145, 4294901760
        %1147 = vmatpush1.msra.mxu0 %v1146
        %1148 = vmatprep.subr.mxu0 0.0
        %v1149 = vand.u32 %v308, 4294901760
        %v1150 = vsub.f32 %v308, %v1149
        %v1151 = vand.u32 %v1150, 4294901760
        %1152 = vmatpush1.msra.mxu0 %v1151
        %1153 = vmatprep.subr.mxu0 0.0
        %v1154 = vand.u32 %v309, 4294901760
        %v1155 = vsub.f32 %v309, %v1154
        %v1156 = vand.u32 %v1155, 4294901760
        %1157 = vmatpush1.msra.mxu0 %v1156
        %1158 = vmatprep.subr.mxu0 0.0
        %v1159 = vand.u32 %v310, 4294901760
        %v1160 = vsub.f32 %v310, %v1159
        %v1161 = vand.u32 %v1160, 4294901760
        %1162 = vmatpush1.msra.mxu0 %v1161
        %1163 = vmatprep.subr.mxu0 0.0
        %v1164 = vand.u32 %v311, 4294901760
        %v1165 = vsub.f32 %v311, %v1164
        %v1166 = vand.u32 %v1165, 4294901760
        %1167 = vmatpush1.msra.mxu0 %v1166
        %1168 = vmatprep.subr.mxu0 0.0
        %v1169 = vand.u32 %v312, 4294901760
        %v1170 = vsub.f32 %v312, %v1169
        %v1171 = vand.u32 %v1170, 4294901760
        %1172 = vmatpush1.msra.mxu0 %v1171
        %1173 = vmatprep.subr.mxu0 0.0
        %v1174 = vand.u32 %v313, 4294901760
        %v1175 = vsub.f32 %v313, %v1174
        %v1176 = vand.u32 %v1175, 4294901760
        %1177 = vmatpush1.msra.mxu0 %v1176
        %1178 = vmatprep.subr.mxu0 0.0
        %v1179 = vand.u32 %v314, 4294901760
        %v1180 = vsub.f32 %v314, %v1179
        %v1181 = vand.u32 %v1180, 4294901760
        %1182 = vmatpush1.msra.mxu0 %v1181
        %1183 = vmatprep.subr.mxu0 0.0
        %v1184 = vand.u32 %v315, 4294901760
        %v1185 = vsub.f32 %v315, %v1184
        %v1186 = vand.u32 %v1185, 4294901760
        %1187 = vmatpush1.msra.mxu0 %v1186
        %1188 = vmatprep.subr.mxu0 0.0
        %v1189 = vand.u32 %v316, 4294901760
        %v1190 = vsub.f32 %v316, %v1189
        %v1191 = vand.u32 %v1190, 4294901760
        %1192 = vmatpush1.msra.mxu0 %v1191
        %v1193 = vand.u32 %v278, 4294901760
        %1194 = vmatprep.mubr.f32.mxu0 %v1193
        %v1195 = vand.u32 %v277, 4294901760
        %1196 = vmatmul.mubr.f32.gmra.mrb[0].mxu0 %v1195
        %v1197 = vpop.f32.mrb[0].mxu0
        %v1198 = vadd.f32 %v997, %v1197
        %v1199 = vpop.f32.mrb[0].mxu0
        %v1200 = vand.u32 %v280, 4294901760
        %1201 = vmatprep.mubr.f32.mxu0 %v1200
        %v1202 = vand.u32 %v279, 4294901760
        %1203 = vmatmul.mubr.f32.gmra.mrb[0].mxu0 %v1202
        %v1204 = vpop.f32.mrb[0].mxu0
        %v1205 = vadd.f32 %v1008, %v1204
        %v1206 = vpop.f32.mrb[0].mxu0
        %v1207 = vand.u32 %v282, 4294901760
        %1208 = vmatprep.mubr.f32.mxu0 %v1207
        %v1209 = vand.u32 %v281, 4294901760
        %1210 = vmatmul.mubr.f32.gmra.mrb[0].mxu0 %v1209
        %v1211 = vpop.f32.mrb[0].mxu0
        %v1212 = vadd.f32 %v1019, %v1211
        %v1213 = vpop.f32.mrb[0].mxu0
        %v1214 = vand.u32 %v284, 4294901760
        %1215 = vmatprep.mubr.f32.mxu0 %v1214
        %v1216 = vand.u32 %v283, 4294901760
        %1217 = vmatmul.mubr.f32.gmra.mrb[0].mxu0 %v1216
        %v1218 = vpop.f32.mrb[0].mxu0
        %v1219 = vadd.f32 %v1030, %v1218
        %v1220 = vpop.f32.mrb[0].mxu0
        %1221 = vdwg.mxu0
        %1222 = vmatprep.subr.mxu0 0.0
        %v1223 = vand.u32 %v285, 4294901760
        %1224 = vmatpush1.msra.mxu0 %v1223
        %1225 = vmatprep.subr.mxu0 0.0
        %v1226 = vand.u32 %v286, 4294901760
        %1227 = vmatpush1.msra.mxu0 %v1226
        %1228 = vmatprep.subr.mxu0 0.0
        %v1229 = vand.u32 %v287, 4294901760
        %1230 = vmatpush1.msra.mxu0 %v1229
        %1231 = vmatprep.subr.mxu0 0.0
        %v1232 = vand.u32 %v288, 4294901760
        %1233 = vmatpush1.msra.mxu0 %v1232
        %1234 = vmatprep.subr.mxu0 0.0
        %v1235 = vand.u32 %v289, 4294901760
        %1236 = vmatpush1.msra.mxu0 %v1235
        %1237 = vmatprep.subr.mxu0 0.0
        %v1238 = vand.u32 %v290, 4294901760
        %1239 = vmatpush1.msra.mxu0 %v1238
        %1240 = vmatprep.subr.mxu0 0.0
        %v1241 = vand.u32 %v291, 4294901760
        %1242 = vmatpush1.msra.mxu0 %v1241
        %1243 = vmatprep.subr.mxu0 0.0
        %v1244 = vand.u32 %v292, 4294901760
        %1245 = vmatpush1.msra.mxu0 %v1244
        %1246 = vmatprep.subr.mxu0 0.0
        %v1247 = vand.u32 %v293, 4294901760
        %1248 = vmatpush1.msra.mxu0 %v1247
        %1249 = vmatprep.subr.mxu0 0.0
        %v1250 = vand.u32 %v294, 4294901760
        %1251 = vmatpush1.msra.mxu0 %v1250
        %1252 = vmatprep.subr.mxu0 0.0
        %v1253 = vand.u32 %v295, 4294901760
        %1254 = vmatpush1.msra.mxu0 %v1253
        %1255 = vmatprep.subr.mxu0 0.0
        %v1256 = vand.u32 %v296, 4294901760
        %1257 = vmatpush1.msra.mxu0 %v1256
        %1258 = vmatprep.subr.mxu0 0.0
        %v1259 = vand.u32 %v297, 4294901760
        %1260 = vmatpush1.msra.mxu0 %v1259
        %1261 = vmatprep.subr.mxu0 0.0
        %v1262 = vand.u32 %v298, 4294901760
        %1263 = vmatpush1.msra.mxu0 %v1262
        %1264 = vmatprep.subr.mxu0 0.0
        %v1265 = vand.u32 %v299, 4294901760
        %1266 = vmatpush1.msra.mxu0 %v1265
        %1267 = vmatprep.subr.mxu0 0.0
        %v1268 = vand.u32 %v300, 4294901760
        %1269 = vmatpush1.msra.mxu0 %v1268
        %1270 = vmatprep.subr.mxu0 0.0
        %v1271 = vand.u32 %v301, 4294901760
        %1272 = vmatpush1.msra.mxu0 %v1271
        %1273 = vmatprep.subr.mxu0 0.0
        %v1274 = vand.u32 %v302, 4294901760
        %1275 = vmatpush1.msra.mxu0 %v1274
        %1276 = vmatprep.subr.mxu0 0.0
        %v1277 = vand.u32 %v303, 4294901760
        %1278 = vmatpush1.msra.mxu0 %v1277
        %1279 = vmatprep.subr.mxu0 0.0
        %v1280 = vand.u32 %v304, 4294901760
        %1281 = vmatpush1.msra.mxu0 %v1280
        %1282 = vmatprep.subr.mxu0 0.0
        %v1283 = vand.u32 %v305, 4294901760
        %1284 = vmatpush1.msra.mxu0 %v1283
        %1285 = vmatprep.subr.mxu0 0.0
        %v1286 = vand.u32 %v306, 4294901760
        %1287 = vmatpush1.msra.mxu0 %v1286
        %1288 = vmatprep.subr.mxu0 0.0
        %v1289 = vand.u32 %v307, 4294901760
        %1290 = vmatpush1.msra.mxu0 %v1289
        %1291 = vmatprep.subr.mxu0 0.0
        %v1292 = vand.u32 %v308, 4294901760
        %1293 = vmatpush1.msra.mxu0 %v1292
        %1294 = vmatprep.subr.mxu0 0.0
        %v1295 = vand.u32 %v309, 4294901760
        %1296 = vmatpush1.msra.mxu0 %v1295
        %1297 = vmatprep.subr.mxu0 0.0
        %v1298 = vand.u32 %v310, 4294901760
        %1299 = vmatpush1.msra.mxu0 %v1298
        %1300 = vmatprep.subr.mxu0 0.0
        %v1301 = vand.u32 %v311, 4294901760
        %1302 = vmatpush1.msra.mxu0 %v1301
        %1303 = vmatprep.subr.mxu0 0.0
        %v1304 = vand.u32 %v312, 4294901760
        %1305 = vmatpush1.msra.mxu0 %v1304
        %1306 = vmatprep.subr.mxu0 0.0
        %v1307 = vand.u32 %v313, 4294901760
        %1308 = vmatpush1.msra.mxu0 %v1307
        %1309 = vmatprep.subr.mxu0 0.0
        %v1310 = vand.u32 %v314, 4294901760
        %1311 = vmatpush1.msra.mxu0 %v1310
        %1312 = vmatprep.subr.mxu0 0.0
        %v1313 = vand.u32 %v315, 4294901760
        %1314 = vmatpush1.msra.mxu0 %v1313
        %1315 = vmatprep.subr.mxu0 0.0
        %v1316 = vand.u32 %v316, 4294901760
        %1317 = vmatpush1.msra.mxu0 %v1316
        %v1318 = vand.u32 %v278, 4294901760
        %1319 = vmatprep.mubr.f32.mxu0 %v1318
        %v1320 = vand.u32 %v277, 4294901760
        %1321 = vmatmul.mubr.f32.gmra.mrb[0].mxu0 %v1320
        %v1322 = vpop.f32.mrb[0].mxu0
        %v1323 = vadd.f32 %v1198, %v1322
        %v1324 = vpop.f32.mrb[0].mxu0
        %v1325 = vand.u32 %v280, 4294901760
        %1326 = vmatprep.mubr.f32.mxu0 %v1325
        %v1327 = vand.u32 %v279, 4294901760
        %1328 = vmatmul.mubr.f32.gmra.mrb[0].mxu0 %v1327
        %v1329 = vpop.f32.mrb[0].mxu0
        %v1330 = vadd.f32 %v1205, %v1329
        %v1331 = vpop.f32.mrb[0].mxu0
        %v1332 = vand.u32 %v282, 4294901760
        %1333 = vmatprep.mubr.f32.mxu0 %v1332
        %v1334 = vand.u32 %v281, 4294901760
        %1335 = vmatmul.mubr.f32.gmra.mrb[0].mxu0 %v1334
        %v1336 = vpop.f32.mrb[0].mxu0
        %v1337 = vadd.f32 %v1212, %v1336
        %v1338 = vpop.f32.mrb[0].mxu0
        %v1339 = vand.u32 %v284, 4294901760
        %1340 = vmatprep.mubr.f32.mxu0 %v1339
        %v1341 = vand.u32 %v283, 4294901760
        %1342 = vmatmul.mubr.f32.gmra.mrb[0].mxu0 %v1341
        %v1343 = vpop.f32.mrb[0].mxu0
        %v1344 = vadd.f32 %v1219, %v1343
        %v1345 = vpop.f32.mrb[0].mxu0
        %1346 = vdwg.mxu0
        %vm1347 = vcmask 130048
        %v1348 = vsel %vm1347, %v1323, 0.0
        %1349 = vadd.xlane.f32.xlu0 %v1348
        %v1350 = vpop.xlane.xlu0 %1349
        %v1351 = vsel %vm1347, %v1330, 0.0
        %1352 = vadd.xlane.f32.xlu0 %v1351
        %v1353 = vpop.xlane.xlu0 %1352
        %v1354 = vsel %vm1347, %v1337, 0.0
        %1355 = vadd.xlane.f32.xlu0 %v1354
        %v1356 = vpop.xlane.xlu0 %1355
        %v1357 = vsel %vm1347, %v1344, 0.0
        %1358 = vadd.xlane.f32.xlu0 %v1357
        %v1359 = vpop.xlane.xlu0 %1358
        %v1360 = vrcp.pop 16.0
        %v1361 = vmul.f32 %v1350, %v1360
        %v1362 = vmul.f32 %v1353, %v1360
        %v1363 = vmul.f32 %v1356, %v1360
        %v1364 = vmul.f32 %v1359, %v1360
        %v1365 = vld [vmem:[%s3] sm:$0x3]
        %v1367 = vlaneseq
        %v1368 = vshrl.u32 %v1367, 7
        %v1369 = vsub.s32 0, %v1368
        %v1370 = vrot.slane %v1365, %v1369
        %1372 = vbcast.lane.b32.xlu0 %v1370, 256
        %v1373 = vpop.permute.xlu0 %1372
        %s1375 = sor.u32 256, 8
        %1376 = vbcast.lane.b32.xlu0 %v1370, %s1375
        %v1377 = vpop.permute.xlu0 %1376
        %s1379 = sor.u32 256, 16
        %1380 = vbcast.lane.b32.xlu0 %v1370, %s1379
        %v1381 = vpop.permute.xlu0 %1380
        %s1383 = sor.u32 256, 24
        %1384 = vbcast.lane.b32.xlu0 %v1370, %s1383
        %v1385 = vpop.permute.xlu0 %1384
        %v1386 = vlaneseq
        %v1387 = vshrl.u32 %v1386, 7
        %v1388 = vsub.s32 1, %v1387
        %v1389 = vrot.slane %v1365, %v1388
        %1391 = vbcast.lane.b32.xlu0 %v1389, 256
        %v1392 = vpop.permute.xlu0 %1391
        %s1394 = sor.u32 256, 8
        %1395 = vbcast.lane.b32.xlu0 %v1389, %s1394
        %v1396 = vpop.permute.xlu0 %1395
        %s1398 = sor.u32 256, 16
        %1399 = vbcast.lane.b32.xlu0 %v1389, %s1398
        %v1400 = vpop.permute.xlu0 %1399
        %s1402 = sor.u32 256, 24
        %1403 = vbcast.lane.b32.xlu0 %v1389, %s1402
        %v1404 = vpop.permute.xlu0 %1403
        %v1413 = vmul.f32 %v1361, %v1373
        %v1414 = vmul.f32 %v1362, %v1377
        %v1415 = vmul.f32 %v1363, %v1381
        %v1416 = vmul.f32 %v1364, %v1385
        %v1417 = vmul.f32 %v1361, %v1392
        %v1418 = vmul.f32 %v1362, %v1396
        %v1419 = vmul.f32 %v1363, %v1400
        %v1420 = vmul.f32 %v1364, %v1404
        %1429 = vset.pattern.permute.xlu0 0
        %1430 = vperm.xlu0 %1429, %v1413
        %v1431 = vpop.permute.xlu0 %1430
        %1432 = vset.pattern.permute.xlu0 0
        %1433 = vperm.xlu0 %1432, %v1414
        %v1434 = vpop.permute.xlu0 %1433
        %1435 = vset.pattern.permute.xlu0 0
        %1436 = vperm.xlu0 %1435, %v1415
        %v1437 = vpop.permute.xlu0 %1436
        %1438 = vset.pattern.permute.xlu0 0
        %1439 = vperm.xlu0 %1438, %v1416
        %v1440 = vpop.permute.xlu0 %1439
        %1441 = vset.pattern.permute.xlu0 0
        %1442 = vperm.xlu0 %1441, %v1417
        %v1443 = vpop.permute.xlu0 %1442
        %1444 = vset.pattern.permute.xlu0 0
        %1445 = vperm.xlu0 %1444, %v1418
        %v1446 = vpop.permute.xlu0 %1445
        %1447 = vset.pattern.permute.xlu0 0
        %1448 = vperm.xlu0 %1447, %v1419
        %v1449 = vpop.permute.xlu0 %1448
        %1450 = vset.pattern.permute.xlu0 0
        %1451 = vperm.xlu0 %1450, %v1420
        %v1452 = vpop.permute.xlu0 %1451
        %v1453 = vlaneseq
        %v1454 = vand.u32 %v1453, 127
        %v1455 = vlaneseq
        %v1456 = vshrl.u32 %v1455, 7
        %v1457 = vsub.s32 %v1454, %v1456
        %v1458 = vrot.slane %v1431, %v1457
        %v1459 = vadd.s32 %v1454, 4294967288
        %v1460 = vlaneseq
        %v1461 = vshrl.u32 %v1460, 7
        %v1462 = vsub.s32 %v1459, %v1461
        %v1463 = vrot.slane %v1434, %v1462
        %vm1464 = vcmask 130112
        %v1465 = vsel %vm1464, %v1463, %v1458
        %v1466 = vadd.s32 %v1454, 4294967280
        %v1467 = vlaneseq
        %v1468 = vshrl.u32 %v1467, 7
        %v1469 = vsub.s32 %v1466, %v1468
        %v1470 = vrot.slane %v1437, %v1469
        %vm1471 = vcmask 195712
        %v1472 = vsel %vm1471, %v1470, %v1465
        %v1473 = vadd.s32 %v1454, 4294967272
        %v1474 = vlaneseq
        %v1475 = vshrl.u32 %v1474, 7
        %v1476 = vsub.s32 %v1473, %v1475
        %v1477 = vrot.slane %v1440, %v1476
        %vm1478 = vcmask 261312
        %v1479 = vsel %vm1478, %v1477, %v1472
        %v1480 = vlaneseq
        %v1481 = vshrl.u32 %v1480, 7
        %v1482 = vsub.s32 %v1454, %v1481
        %v1483 = vrot.slane %v1443, %v1482
        %v1484 = vlaneseq
        %v1485 = vshrl.u32 %v1484, 7
        %v1486 = vsub.s32 %v1459, %v1485
        %v1487 = vrot.slane %v1446, %v1486
        %v1488 = vsel %vm1464, %v1487, %v1483
        %v1489 = vlaneseq
        %v1490 = vshrl.u32 %v1489, 7
        %v1491 = vsub.s32 %v1466, %v1490
        %v1492 = vrot.slane %v1449, %v1491
        %v1493 = vsel %vm1471, %v1492, %v1488
        %v1494 = vlaneseq
        %v1495 = vshrl.u32 %v1494, 7
        %v1496 = vsub.s32 %v1473, %v1495
        %v1497 = vrot.slane %v1452, %v1496
        %v1498 = vsel %vm1478, %v1497, %v1493
        %vm1499 = vcmask 1041409
        %v1500 = vsel %vm1499, %v1498, %v1479
        %vm1502 = vcmask 254976
        %v1503 = vsel %vm1502, %v1500, 0.0
        %1504 = vadd.xlane.f32.xlu0 %v1503
        %v1505 = vpop.xlane.xlu0 %1504
        %v1506 = vmax.f32 %v1505, 0.0
        %v1507 = vld [vmem:[%s4] sm:$0x3]
        %v1508 = vmul.f32 %v1506, %v1507
        %v1509 = vsel %vm1502, %v1508, 0.0
        %v1510 = vrot.slane %v1509, 4
        %v1511 = vadd.f32 %v1509, %v1510
        %v1512 = vrot.slane %v1511, 2
        %v1513 = vadd.f32 %v1511, %v1512
        %v1514 = vrot.slane %v1513, 1
        %v1515 = vadd.f32 %v1513, %v1514
        %v1516 = vmul.f32 %v1515, 0.5
        %v1517 = vtanh.pop %v1516
        %v1518 = vmul.f32 %v1517, 0.5
        %v1519 = vadd.f32 %v1518, 0.5
        %1521 = vbcast.lane.b32.xlu0 %v1519, 256
        %v1522 = vpop.permute.xlu0 %1521
        %s1524 = sor.u32 256, 8
        %1525 = vbcast.lane.b32.xlu0 %v1519, %s1524
        %v1526 = vpop.permute.xlu0 %1525
        %s1528 = sor.u32 256, 16
        %1529 = vbcast.lane.b32.xlu0 %v1519, %s1528
        %v1530 = vpop.permute.xlu0 %1529
        %s1532 = sor.u32 256, 24
        %1533 = vbcast.lane.b32.xlu0 %v1519, %s1532
        %v1534 = vpop.permute.xlu0 %1533
        %v1535 = vmul.f32 %v1522, %v1323
        %v1536 = vmul.f32 %v1526, %v1330
        %v1537 = vmul.f32 %v1530, %v1337
        %v1538 = vmul.f32 %v1534, %v1344
        %vm1539 = vcmask 261120
        %v1540 = vsel %vm1539, %v1535, 0.0
        %v1541 = vsel %vm1539, %v1536, 0.0
        %v1542 = vadd.f32 %v1540, %v1541
        %v1543 = vsel %vm1539, %v1537, 0.0
        %v1544 = vadd.f32 %v1542, %v1543
        %v1545 = vsel %vm1539, %v1538, 0.0
        %v1546 = vadd.f32 %v1544, %v1545
        %v1547 = vrot.slane %v1546, 4
        %v1548 = vadd.f32 %v1546, %v1547
        %v1549 = vrot.slane %v1548, 2
        %v1550 = vadd.f32 %v1548, %v1549
        %v1551 = vrot.slane %v1550, 1
        %v1552 = vadd.f32 %v1550, %v1551
        %v1553 = vrcp.pop 32.0
        %v1554 = vmul.f32 %v1552, %v1553
        %v1555 = vld [vmem:[%s5] sm:$0xff]
        %v1556 = vld [vmem:[%s5 + $0x8] sm:$0xff]
        %v1557 = vld [vmem:[%s5 + $0x10] sm:$0xff]
        %v1558 = vld [vmem:[%s5 + $0x18] sm:$0xff]
        %v1559 = vmul.f32 %v1555, %v1554
        %v1560 = vmul.f32 %v1556, %v1554
        %v1561 = vmul.f32 %v1557, %v1554
        %v1562 = vmul.f32 %v1558, %v1554
        %v1563 = vld [vmem:[%s2] sm:$0xff]
        %v1564 = vld [vmem:[%s2 + $0x8] sm:$0xff]
        %v1565 = vld [vmem:[%s2 + $0x10] sm:$0xff]
        %v1566 = vld [vmem:[%s2 + $0x18] sm:$0xff]
        %v1567 = vld [vmem:[%s2 + $0x20] sm:$0xff]
        %v1568 = vld [vmem:[%s2 + $0x28] sm:$0xff]
        %v1569 = vld [vmem:[%s2 + $0x30] sm:$0xff]
        %v1570 = vld [vmem:[%s2 + $0x38] sm:$0xff]
        %v1572 = vsel %vm1539, %v1559, 0
        %v1575 = vsel %vm1539, %v1560, 0
        %v1578 = vsel %vm1539, %v1561, 0
        %v1581 = vsel %vm1539, %v1562, 0
        %v1583 = vand.u32 %v1564, 4294901760
        %1584 = vmatprep.subr.mxu0 %v1583
        %v1585 = vand.u32 %v1563, 4294901760
        %1586 = vmatpush1.msra.mxu0 %v1585
        %v1587 = vand.u32 %v1566, 4294901760
        %1588 = vmatprep.subr.mxu0 %v1587
        %v1589 = vand.u32 %v1565, 4294901760
        %1590 = vmatpush1.msra.mxu0 %v1589
        %v1591 = vand.u32 %v1568, 4294901760
        %1592 = vmatprep.subr.mxu0 %v1591
        %v1593 = vand.u32 %v1567, 4294901760
        %1594 = vmatpush1.msra.mxu0 %v1593
        %v1595 = vand.u32 %v1570, 4294901760
        %1596 = vmatprep.subr.mxu0 %v1595
        %v1597 = vand.u32 %v1569, 4294901760
        %1598 = vmatpush1.msra.mxu0 %v1597
        %1599 = vmatprep.subr.mxu0 0.0
        %1600 = vmatpush1.msra.mxu0 0.0
        %1601 = vmatprep.subr.mxu0 0.0
        %1602 = vmatpush1.msra.mxu0 0.0
        %1603 = vmatprep.subr.mxu0 0.0
        %1604 = vmatpush1.msra.mxu0 0.0
        %1605 = vmatprep.subr.mxu0 0.0
        %1606 = vmatpush1.msra.mxu0 0.0
        %1607 = vmatprep.subr.mxu0 0.0
        %1608 = vmatpush1.msra.mxu0 0.0
        %1609 = vmatprep.subr.mxu0 0.0
        %1610 = vmatpush1.msra.mxu0 0.0
        %1611 = vmatprep.subr.mxu0 0.0
        %1612 = vmatpush1.msra.mxu0 0.0
        %1613 = vmatprep.subr.mxu0 0.0
        %1614 = vmatpush1.msra.mxu0 0.0
        %1615 = vmatprep.subr.mxu0 0.0
        %1616 = vmatpush1.msra.mxu0 0.0
        %1617 = vmatprep.subr.mxu0 0.0
        %1618 = vmatpush1.msra.mxu0 0.0
        %1619 = vmatprep.subr.mxu0 0.0
        %1620 = vmatpush1.msra.mxu0 0.0
        %1621 = vmatprep.subr.mxu0 0.0
        %1622 = vmatpush1.msra.mxu0 0.0
        %1623 = vmatprep.subr.mxu0 0.0
        %1624 = vmatpush1.msra.mxu0 0.0
        %1625 = vmatprep.subr.mxu0 0.0
        %1626 = vmatpush1.msra.mxu0 0.0
        %1627 = vmatprep.subr.mxu0 0.0
        %1628 = vmatpush1.msra.mxu0 0.0
        %1629 = vmatprep.subr.mxu0 0.0
        %1630 = vmatpush1.msra.mxu0 0.0
        %1631 = vmatprep.subr.mxu0 0.0
        %1632 = vmatpush1.msra.mxu0 0.0
        %1633 = vmatprep.subr.mxu0 0.0
        %1634 = vmatpush1.msra.mxu0 0.0
        %1635 = vmatprep.subr.mxu0 0.0
        %1636 = vmatpush1.msra.mxu0 0.0
        %1637 = vmatprep.subr.mxu0 0.0
        %1638 = vmatpush1.msra.mxu0 0.0
        %1639 = vmatprep.subr.mxu0 0.0
        %1640 = vmatpush1.msra.mxu0 0.0
        %1641 = vmatprep.subr.mxu0 0.0
        %1642 = vmatpush1.msra.mxu0 0.0
        %1643 = vmatprep.subr.mxu0 0.0
        %1644 = vmatpush1.msra.mxu0 0.0
        %1645 = vmatprep.subr.mxu0 0.0
        %1646 = vmatpush1.msra.mxu0 0.0
        %1647 = vmatprep.subr.mxu0 0.0
        %1648 = vmatpush1.msra.mxu0 0.0
        %1649 = vmatprep.subr.mxu0 0.0
        %1650 = vmatpush1.msra.mxu0 0.0
        %1651 = vmatprep.subr.mxu0 0.0
        %1652 = vmatpush1.msra.mxu0 0.0
        %1653 = vmatprep.subr.mxu0 0.0
        %1654 = vmatpush1.msra.mxu0 0.0
        %1655 = vmatprep.mubr.f32.mxu0 0.0
        %v1656 = vand.u32 %v1572, 4294901760
        %v1657 = vsub.f32 %v1572, %v1656
        %v1658 = vand.u32 %v1657, 4294901760
        %v1659 = vsub.f32 %v1657, %v1658
        %v1660 = vand.u32 %v1659, 4294901760
        %1661 = vmatmul.mubr.f32.gmra.mrb[0].mxu0 %v1660
        %v1662 = vpop.f32.mrb[0].mxu0
        %v1663 = vadd.f32 0.0, %v1662
        %v1664 = vpop.f32.mrb[0].mxu0
        %v1665 = vadd.f32 0.0, %v1664
        %1666 = vmatprep.mubr.f32.mxu0 0.0
        %v1667 = vand.u32 %v1575, 4294901760
        %v1668 = vsub.f32 %v1575, %v1667
        %v1669 = vand.u32 %v1668, 4294901760
        %v1670 = vsub.f32 %v1668, %v1669
        %v1671 = vand.u32 %v1670, 4294901760
        %1672 = vmatmul.mubr.f32.gmra.mrb[0].mxu0 %v1671
        %v1673 = vpop.f32.mrb[0].mxu0
        %v1674 = vadd.f32 0.0, %v1673
        %v1675 = vpop.f32.mrb[0].mxu0
        %v1676 = vadd.f32 0.0, %v1675
        %1677 = vmatprep.mubr.f32.mxu0 0.0
        %v1678 = vand.u32 %v1578, 4294901760
        %v1679 = vsub.f32 %v1578, %v1678
        %v1680 = vand.u32 %v1679, 4294901760
        %v1681 = vsub.f32 %v1679, %v1680
        %v1682 = vand.u32 %v1681, 4294901760
        %1683 = vmatmul.mubr.f32.gmra.mrb[0].mxu0 %v1682
        %v1684 = vpop.f32.mrb[0].mxu0
        %v1685 = vadd.f32 0.0, %v1684
        %v1686 = vpop.f32.mrb[0].mxu0
        %v1687 = vadd.f32 0.0, %v1686
        %1688 = vmatprep.mubr.f32.mxu0 0.0
        %v1689 = vand.u32 %v1581, 4294901760
        %v1690 = vsub.f32 %v1581, %v1689
        %v1691 = vand.u32 %v1690, 4294901760
        %v1692 = vsub.f32 %v1690, %v1691
        %v1693 = vand.u32 %v1692, 4294901760
        %1694 = vmatmul.mubr.f32.gmra.mrb[0].mxu0 %v1693
        %v1695 = vpop.f32.mrb[0].mxu0
        %v1696 = vadd.f32 0.0, %v1695
        %v1697 = vpop.f32.mrb[0].mxu0
        %v1698 = vadd.f32 0.0, %v1697
        %1699 = vdwg.mxu0
        %v1700 = vand.u32 %v1564, 4294901760
        %v1701 = vsub.f32 %v1564, %v1700
        %v1702 = vand.u32 %v1701, 4294901760
        %v1703 = vsub.f32 %v1701, %v1702
        %v1704 = vand.u32 %v1703, 4294901760
        %1705 = vmatprep.subr.mxu0 %v1704
        %v1706 = vand.u32 %v1563, 4294901760
        %v1707 = vsub.f32 %v1563, %v1706
        %v1708 = vand.u32 %v1707, 4294901760
        %v1709 = vsub.f32 %v1707, %v1708
        %v1710 = vand.u32 %v1709, 4294901760
        %1711 = vmatpush1.msra.mxu0 %v1710
        %v1712 = vand.u32 %v1566, 4294901760
        %v1713 = vsub.f32 %v1566, %v1712
        %v1714 = vand.u32 %v1713, 4294901760
        %v1715 = vsub.f32 %v1713, %v1714
        %v1716 = vand.u32 %v1715, 4294901760
        %1717 = vmatprep.subr.mxu0 %v1716
        %v1718 = vand.u32 %v1565, 4294901760
        %v1719 = vsub.f32 %v1565, %v1718
        %v1720 = vand.u32 %v1719, 4294901760
        %v1721 = vsub.f32 %v1719, %v1720
        %v1722 = vand.u32 %v1721, 4294901760
        %1723 = vmatpush1.msra.mxu0 %v1722
        %v1724 = vand.u32 %v1568, 4294901760
        %v1725 = vsub.f32 %v1568, %v1724
        %v1726 = vand.u32 %v1725, 4294901760
        %v1727 = vsub.f32 %v1725, %v1726
        %v1728 = vand.u32 %v1727, 4294901760
        %1729 = vmatprep.subr.mxu0 %v1728
        %v1730 = vand.u32 %v1567, 4294901760
        %v1731 = vsub.f32 %v1567, %v1730
        %v1732 = vand.u32 %v1731, 4294901760
        %v1733 = vsub.f32 %v1731, %v1732
        %v1734 = vand.u32 %v1733, 4294901760
        %1735 = vmatpush1.msra.mxu0 %v1734
        %v1736 = vand.u32 %v1570, 4294901760
        %v1737 = vsub.f32 %v1570, %v1736
        %v1738 = vand.u32 %v1737, 4294901760
        %v1739 = vsub.f32 %v1737, %v1738
        %v1740 = vand.u32 %v1739, 4294901760
        %1741 = vmatprep.subr.mxu0 %v1740
        %v1742 = vand.u32 %v1569, 4294901760
        %v1743 = vsub.f32 %v1569, %v1742
        %v1744 = vand.u32 %v1743, 4294901760
        %v1745 = vsub.f32 %v1743, %v1744
        %v1746 = vand.u32 %v1745, 4294901760
        %1747 = vmatpush1.msra.mxu0 %v1746
        %1748 = vmatprep.subr.mxu0 0.0
        %1749 = vmatpush1.msra.mxu0 0.0
        %1750 = vmatprep.subr.mxu0 0.0
        %1751 = vmatpush1.msra.mxu0 0.0
        %1752 = vmatprep.subr.mxu0 0.0
        %1753 = vmatpush1.msra.mxu0 0.0
        %1754 = vmatprep.subr.mxu0 0.0
        %1755 = vmatpush1.msra.mxu0 0.0
        %1756 = vmatprep.subr.mxu0 0.0
        %1757 = vmatpush1.msra.mxu0 0.0
        %1758 = vmatprep.subr.mxu0 0.0
        %1759 = vmatpush1.msra.mxu0 0.0
        %1760 = vmatprep.subr.mxu0 0.0
        %1761 = vmatpush1.msra.mxu0 0.0
        %1762 = vmatprep.subr.mxu0 0.0
        %1763 = vmatpush1.msra.mxu0 0.0
        %1764 = vmatprep.subr.mxu0 0.0
        %1765 = vmatpush1.msra.mxu0 0.0
        %1766 = vmatprep.subr.mxu0 0.0
        %1767 = vmatpush1.msra.mxu0 0.0
        %1768 = vmatprep.subr.mxu0 0.0
        %1769 = vmatpush1.msra.mxu0 0.0
        %1770 = vmatprep.subr.mxu0 0.0
        %1771 = vmatpush1.msra.mxu0 0.0
        %1772 = vmatprep.subr.mxu0 0.0
        %1773 = vmatpush1.msra.mxu0 0.0
        %1774 = vmatprep.subr.mxu0 0.0
        %1775 = vmatpush1.msra.mxu0 0.0
        %1776 = vmatprep.subr.mxu0 0.0
        %1777 = vmatpush1.msra.mxu0 0.0
        %1778 = vmatprep.subr.mxu0 0.0
        %1779 = vmatpush1.msra.mxu0 0.0
        %1780 = vmatprep.subr.mxu0 0.0
        %1781 = vmatpush1.msra.mxu0 0.0
        %1782 = vmatprep.subr.mxu0 0.0
        %1783 = vmatpush1.msra.mxu0 0.0
        %1784 = vmatprep.subr.mxu0 0.0
        %1785 = vmatpush1.msra.mxu0 0.0
        %1786 = vmatprep.subr.mxu0 0.0
        %1787 = vmatpush1.msra.mxu0 0.0
        %1788 = vmatprep.subr.mxu0 0.0
        %1789 = vmatpush1.msra.mxu0 0.0
        %1790 = vmatprep.subr.mxu0 0.0
        %1791 = vmatpush1.msra.mxu0 0.0
        %1792 = vmatprep.subr.mxu0 0.0
        %1793 = vmatpush1.msra.mxu0 0.0
        %1794 = vmatprep.subr.mxu0 0.0
        %1795 = vmatpush1.msra.mxu0 0.0
        %1796 = vmatprep.subr.mxu0 0.0
        %1797 = vmatpush1.msra.mxu0 0.0
        %1798 = vmatprep.subr.mxu0 0.0
        %1799 = vmatpush1.msra.mxu0 0.0
        %1800 = vmatprep.subr.mxu0 0.0
        %1801 = vmatpush1.msra.mxu0 0.0
        %1802 = vmatprep.subr.mxu0 0.0
        %1803 = vmatpush1.msra.mxu0 0.0
        %1804 = vmatprep.mubr.f32.mxu0 0.0
        %v1805 = vand.u32 %v1572, 4294901760
        %1806 = vmatmul.mubr.f32.gmra.mrb[0].mxu0 %v1805
        %v1807 = vpop.f32.mrb[0].mxu0
        %v1808 = vadd.f32 %v1663, %v1807
        %v1809 = vpop.f32.mrb[0].mxu0
        %v1810 = vadd.f32 %v1665, %v1809
        %1811 = vmatprep.mubr.f32.mxu0 0.0
        %v1812 = vand.u32 %v1575, 4294901760
        %1813 = vmatmul.mubr.f32.gmra.mrb[0].mxu0 %v1812
        %v1814 = vpop.f32.mrb[0].mxu0
        %v1815 = vadd.f32 %v1674, %v1814
        %v1816 = vpop.f32.mrb[0].mxu0
        %v1817 = vadd.f32 %v1676, %v1816
        %1818 = vmatprep.mubr.f32.mxu0 0.0
        %v1819 = vand.u32 %v1578, 4294901760
        %1820 = vmatmul.mubr.f32.gmra.mrb[0].mxu0 %v1819
        %v1821 = vpop.f32.mrb[0].mxu0
        %v1822 = vadd.f32 %v1685, %v1821
        %v1823 = vpop.f32.mrb[0].mxu0
        %v1824 = vadd.f32 %v1687, %v1823
        %1825 = vmatprep.mubr.f32.mxu0 0.0
        %v1826 = vand.u32 %v1581, 4294901760
        %1827 = vmatmul.mubr.f32.gmra.mrb[0].mxu0 %v1826
        %v1828 = vpop.f32.mrb[0].mxu0
        %v1829 = vadd.f32 %v1696, %v1828
        %v1830 = vpop.f32.mrb[0].mxu0
        %v1831 = vadd.f32 %v1698, %v1830
        %1832 = vdwg.mxu0
        %v1833 = vand.u32 %v1564, 4294901760
        %v1834 = vsub.f32 %v1564, %v1833
        %1835 = vmatprep.subr.mxu0 %v1834
        %v1836 = vand.u32 %v1563, 4294901760
        %v1837 = vsub.f32 %v1563, %v1836
        %1838 = vmatpush1.msra.mxu0 %v1837
        %v1839 = vand.u32 %v1566, 4294901760
        %v1840 = vsub.f32 %v1566, %v1839
        %1841 = vmatprep.subr.mxu0 %v1840
        %v1842 = vand.u32 %v1565, 4294901760
        %v1843 = vsub.f32 %v1565, %v1842
        %1844 = vmatpush1.msra.mxu0 %v1843
        %v1845 = vand.u32 %v1568, 4294901760
        %v1846 = vsub.f32 %v1568, %v1845
        %1847 = vmatprep.subr.mxu0 %v1846
        %v1848 = vand.u32 %v1567, 4294901760
        %v1849 = vsub.f32 %v1567, %v1848
        %1850 = vmatpush1.msra.mxu0 %v1849
        %v1851 = vand.u32 %v1570, 4294901760
        %v1852 = vsub.f32 %v1570, %v1851
        %1853 = vmatprep.subr.mxu0 %v1852
        %v1854 = vand.u32 %v1569, 4294901760
        %v1855 = vsub.f32 %v1569, %v1854
        %1856 = vmatpush1.msra.mxu0 %v1855
        %1857 = vmatprep.subr.mxu0 0.0
        %1858 = vmatpush1.msra.mxu0 0.0
        %1859 = vmatprep.subr.mxu0 0.0
        %1860 = vmatpush1.msra.mxu0 0.0
        %1861 = vmatprep.subr.mxu0 0.0
        %1862 = vmatpush1.msra.mxu0 0.0
        %1863 = vmatprep.subr.mxu0 0.0
        %1864 = vmatpush1.msra.mxu0 0.0
        %1865 = vmatprep.subr.mxu0 0.0
        %1866 = vmatpush1.msra.mxu0 0.0
        %1867 = vmatprep.subr.mxu0 0.0
        %1868 = vmatpush1.msra.mxu0 0.0
        %1869 = vmatprep.subr.mxu0 0.0
        %1870 = vmatpush1.msra.mxu0 0.0
        %1871 = vmatprep.subr.mxu0 0.0
        %1872 = vmatpush1.msra.mxu0 0.0
        %1873 = vmatprep.subr.mxu0 0.0
        %1874 = vmatpush1.msra.mxu0 0.0
        %1875 = vmatprep.subr.mxu0 0.0
        %1876 = vmatpush1.msra.mxu0 0.0
        %1877 = vmatprep.subr.mxu0 0.0
        %1878 = vmatpush1.msra.mxu0 0.0
        %1879 = vmatprep.subr.mxu0 0.0
        %1880 = vmatpush1.msra.mxu0 0.0
        %1881 = vmatprep.subr.mxu0 0.0
        %1882 = vmatpush1.msra.mxu0 0.0
        %1883 = vmatprep.subr.mxu0 0.0
        %1884 = vmatpush1.msra.mxu0 0.0
        %1885 = vmatprep.subr.mxu0 0.0
        %1886 = vmatpush1.msra.mxu0 0.0
        %1887 = vmatprep.subr.mxu0 0.0
        %1888 = vmatpush1.msra.mxu0 0.0
        %1889 = vmatprep.subr.mxu0 0.0
        %1890 = vmatpush1.msra.mxu0 0.0
        %1891 = vmatprep.subr.mxu0 0.0
        %1892 = vmatpush1.msra.mxu0 0.0
        %1893 = vmatprep.subr.mxu0 0.0
        %1894 = vmatpush1.msra.mxu0 0.0
        %1895 = vmatprep.subr.mxu0 0.0
        %1896 = vmatpush1.msra.mxu0 0.0
        %1897 = vmatprep.subr.mxu0 0.0
        %1898 = vmatpush1.msra.mxu0 0.0
        %1899 = vmatprep.subr.mxu0 0.0
        %1900 = vmatpush1.msra.mxu0 0.0
        %1901 = vmatprep.subr.mxu0 0.0
        %1902 = vmatpush1.msra.mxu0 0.0
        %1903 = vmatprep.subr.mxu0 0.0
        %1904 = vmatpush1.msra.mxu0 0.0
        %1905 = vmatprep.subr.mxu0 0.0
        %1906 = vmatpush1.msra.mxu0 0.0
        %1907 = vmatprep.subr.mxu0 0.0
        %1908 = vmatpush1.msra.mxu0 0.0
        %1909 = vmatprep.subr.mxu0 0.0
        %1910 = vmatpush1.msra.mxu0 0.0
        %1911 = vmatprep.subr.mxu0 0.0
        %1912 = vmatpush1.msra.mxu0 0.0
        %1913 = vmatprep.mubr.f32.mxu0 0.0
        %v1914 = vand.u32 %v1572, 4294901760
        %v1915 = vsub.f32 %v1572, %v1914
        %1916 = vmatmul.mubr.f32.gmra.mrb[0].mxu0 %v1915
        %v1917 = vpop.f32.mrb[0].mxu0
        %v1918 = vadd.f32 %v1808, %v1917
        %v1919 = vpop.f32.mrb[0].mxu0
        %v1920 = vadd.f32 %v1810, %v1919
        %1921 = vmatprep.mubr.f32.mxu0 0.0
        %v1922 = vand.u32 %v1575, 4294901760
        %v1923 = vsub.f32 %v1575, %v1922
        %1924 = vmatmul.mubr.f32.gmra.mrb[0].mxu0 %v1923
        %v1925 = vpop.f32.mrb[0].mxu0
        %v1926 = vadd.f32 %v1815, %v1925
        %v1927 = vpop.f32.mrb[0].mxu0
        %v1928 = vadd.f32 %v1817, %v1927
        %1929 = vmatprep.mubr.f32.mxu0 0.0
        %v1930 = vand.u32 %v1578, 4294901760
        %v1931 = vsub.f32 %v1578, %v1930
        %1932 = vmatmul.mubr.f32.gmra.mrb[0].mxu0 %v1931
        %v1933 = vpop.f32.mrb[0].mxu0
        %v1934 = vadd.f32 %v1822, %v1933
        %v1935 = vpop.f32.mrb[0].mxu0
        %v1936 = vadd.f32 %v1824, %v1935
        %1937 = vmatprep.mubr.f32.mxu0 0.0
        %v1938 = vand.u32 %v1581, 4294901760
        %v1939 = vsub.f32 %v1581, %v1938
        %1940 = vmatmul.mubr.f32.gmra.mrb[0].mxu0 %v1939
        %v1941 = vpop.f32.mrb[0].mxu0
        %v1942 = vadd.f32 %v1829, %v1941
        %v1943 = vpop.f32.mrb[0].mxu0
        %v1944 = vadd.f32 %v1831, %v1943
        %1945 = vdwg.mxu0
        %v1946 = vand.u32 %v1564, 4294901760
        %1947 = vmatprep.subr.mxu0 %v1946
        %v1948 = vand.u32 %v1563, 4294901760
        %1949 = vmatpush1.msra.mxu0 %v1948
        %v1950 = vand.u32 %v1566, 4294901760
        %1951 = vmatprep.subr.mxu0 %v1950
        %v1952 = vand.u32 %v1565, 4294901760
        %1953 = vmatpush1.msra.mxu0 %v1952
        %v1954 = vand.u32 %v1568, 4294901760
        %1955 = vmatprep.subr.mxu0 %v1954
        %v1956 = vand.u32 %v1567, 4294901760
        %1957 = vmatpush1.msra.mxu0 %v1956
        %v1958 = vand.u32 %v1570, 4294901760
        %1959 = vmatprep.subr.mxu0 %v1958
        %v1960 = vand.u32 %v1569, 4294901760
        %1961 = vmatpush1.msra.mxu0 %v1960
        %1962 = vmatprep.subr.mxu0 0.0
        %1963 = vmatpush1.msra.mxu0 0.0
        %1964 = vmatprep.subr.mxu0 0.0
        %1965 = vmatpush1.msra.mxu0 0.0
        %1966 = vmatprep.subr.mxu0 0.0
        %1967 = vmatpush1.msra.mxu0 0.0
        %1968 = vmatprep.subr.mxu0 0.0
        %1969 = vmatpush1.msra.mxu0 0.0
        %1970 = vmatprep.subr.mxu0 0.0
        %1971 = vmatpush1.msra.mxu0 0.0
        %1972 = vmatprep.subr.mxu0 0.0
        %1973 = vmatpush1.msra.mxu0 0.0
        %1974 = vmatprep.subr.mxu0 0.0
        %1975 = vmatpush1.msra.mxu0 0.0
        %1976 = vmatprep.subr.mxu0 0.0
        %1977 = vmatpush1.msra.mxu0 0.0
        %1978 = vmatprep.subr.mxu0 0.0
        %1979 = vmatpush1.msra.mxu0 0.0
        %1980 = vmatprep.subr.mxu0 0.0
        %1981 = vmatpush1.msra.mxu0 0.0
        %1982 = vmatprep.subr.mxu0 0.0
        %1983 = vmatpush1.msra.mxu0 0.0
        %1984 = vmatprep.subr.mxu0 0.0
        %1985 = vmatpush1.msra.mxu0 0.0
        %1986 = vmatprep.subr.mxu0 0.0
        %1987 = vmatpush1.msra.mxu0 0.0
        %1988 = vmatprep.subr.mxu0 0.0
        %1989 = vmatpush1.msra.mxu0 0.0
        %1990 = vmatprep.subr.mxu0 0.0
        %1991 = vmatpush1.msra.mxu0 0.0
        %1992 = vmatprep.subr.mxu0 0.0
        %1993 = vmatpush1.msra.mxu0 0.0
        %1994 = vmatprep.subr.mxu0 0.0
        %1995 = vmatpush1.msra.mxu0 0.0
        %1996 = vmatprep.subr.mxu0 0.0
        %1997 = vmatpush1.msra.mxu0 0.0
        %1998 = vmatprep.subr.mxu0 0.0
        %1999 = vmatpush1.msra.mxu0 0.0
        %2000 = vmatprep.subr.mxu0 0.0
        %2001 = vmatpush1.msra.mxu0 0.0
        %2002 = vmatprep.subr.mxu0 0.0
        %2003 = vmatpush1.msra.mxu0 0.0
        %2004 = vmatprep.subr.mxu0 0.0
        %2005 = vmatpush1.msra.mxu0 0.0
        %2006 = vmatprep.subr.mxu0 0.0
        %2007 = vmatpush1.msra.mxu0 0.0
        %2008 = vmatprep.subr.mxu0 0.0
        %2009 = vmatpush1.msra.mxu0 0.0
        %2010 = vmatprep.subr.mxu0 0.0
        %2011 = vmatpush1.msra.mxu0 0.0
        %2012 = vmatprep.subr.mxu0 0.0
        %2013 = vmatpush1.msra.mxu0 0.0
        %2014 = vmatprep.subr.mxu0 0.0
        %2015 = vmatpush1.msra.mxu0 0.0
        %2016 = vmatprep.subr.mxu0 0.0
        %2017 = vmatpush1.msra.mxu0 0.0
        %2018 = vmatprep.mubr.f32.mxu0 0.0
        %v2019 = vand.u32 %v1572, 4294901760
        %v2020 = vsub.f32 %v1572, %v2019
        %v2021 = vand.u32 %v2020, 4294901760
        %2022 = vmatmul.mubr.f32.gmra.mrb[0].mxu0 %v2021
        %v2023 = vpop.f32.mrb[0].mxu0
        %v2024 = vadd.f32 %v1918, %v2023
        %v2025 = vpop.f32.mrb[0].mxu0
        %v2026 = vadd.f32 %v1920, %v2025
        %2027 = vmatprep.mubr.f32.mxu0 0.0
        %v2028 = vand.u32 %v1575, 4294901760
        %v2029 = vsub.f32 %v1575, %v2028
        %v2030 = vand.u32 %v2029, 4294901760
        %2031 = vmatmul.mubr.f32.gmra.mrb[0].mxu0 %v2030
        %v2032 = vpop.f32.mrb[0].mxu0
        %v2033 = vadd.f32 %v1926, %v2032
        %v2034 = vpop.f32.mrb[0].mxu0
        %v2035 = vadd.f32 %v1928, %v2034
        %2036 = vmatprep.mubr.f32.mxu0 0.0
        %v2037 = vand.u32 %v1578, 4294901760
        %v2038 = vsub.f32 %v1578, %v2037
        %v2039 = vand.u32 %v2038, 4294901760
        %2040 = vmatmul.mubr.f32.gmra.mrb[0].mxu0 %v2039
        %v2041 = vpop.f32.mrb[0].mxu0
        %v2042 = vadd.f32 %v1934, %v2041
        %v2043 = vpop.f32.mrb[0].mxu0
        %v2044 = vadd.f32 %v1936, %v2043
        %2045 = vmatprep.mubr.f32.mxu0 0.0
        %v2046 = vand.u32 %v1581, 4294901760
        %v2047 = vsub.f32 %v1581, %v2046
        %v2048 = vand.u32 %v2047, 4294901760
        %2049 = vmatmul.mubr.f32.gmra.mrb[0].mxu0 %v2048
        %v2050 = vpop.f32.mrb[0].mxu0
        %v2051 = vadd.f32 %v1942, %v2050
        %v2052 = vpop.f32.mrb[0].mxu0
        %v2053 = vadd.f32 %v1944, %v2052
        %2054 = vdwg.mxu0
        %v2055 = vand.u32 %v1564, 4294901760
        %v2056 = vsub.f32 %v1564, %v2055
        %v2057 = vand.u32 %v2056, 4294901760
        %2058 = vmatprep.subr.mxu0 %v2057
        %v2059 = vand.u32 %v1563, 4294901760
        %v2060 = vsub.f32 %v1563, %v2059
        %v2061 = vand.u32 %v2060, 4294901760
        %2062 = vmatpush1.msra.mxu0 %v2061
        %v2063 = vand.u32 %v1566, 4294901760
        %v2064 = vsub.f32 %v1566, %v2063
        %v2065 = vand.u32 %v2064, 4294901760
        %2066 = vmatprep.subr.mxu0 %v2065
        %v2067 = vand.u32 %v1565, 4294901760
        %v2068 = vsub.f32 %v1565, %v2067
        %v2069 = vand.u32 %v2068, 4294901760
        %2070 = vmatpush1.msra.mxu0 %v2069
        %v2071 = vand.u32 %v1568, 4294901760
        %v2072 = vsub.f32 %v1568, %v2071
        %v2073 = vand.u32 %v2072, 4294901760
        %2074 = vmatprep.subr.mxu0 %v2073
        %v2075 = vand.u32 %v1567, 4294901760
        %v2076 = vsub.f32 %v1567, %v2075
        %v2077 = vand.u32 %v2076, 4294901760
        %2078 = vmatpush1.msra.mxu0 %v2077
        %v2079 = vand.u32 %v1570, 4294901760
        %v2080 = vsub.f32 %v1570, %v2079
        %v2081 = vand.u32 %v2080, 4294901760
        %2082 = vmatprep.subr.mxu0 %v2081
        %v2083 = vand.u32 %v1569, 4294901760
        %v2084 = vsub.f32 %v1569, %v2083
        %v2085 = vand.u32 %v2084, 4294901760
        %2086 = vmatpush1.msra.mxu0 %v2085
        %2087 = vmatprep.subr.mxu0 0.0
        %2088 = vmatpush1.msra.mxu0 0.0
        %2089 = vmatprep.subr.mxu0 0.0
        %2090 = vmatpush1.msra.mxu0 0.0
        %2091 = vmatprep.subr.mxu0 0.0
        %2092 = vmatpush1.msra.mxu0 0.0
        %2093 = vmatprep.subr.mxu0 0.0
        %2094 = vmatpush1.msra.mxu0 0.0
        %2095 = vmatprep.subr.mxu0 0.0
        %2096 = vmatpush1.msra.mxu0 0.0
        %2097 = vmatprep.subr.mxu0 0.0
        %2098 = vmatpush1.msra.mxu0 0.0
        %2099 = vmatprep.subr.mxu0 0.0
        %2100 = vmatpush1.msra.mxu0 0.0
        %2101 = vmatprep.subr.mxu0 0.0
        %2102 = vmatpush1.msra.mxu0 0.0
        %2103 = vmatprep.subr.mxu0 0.0
        %2104 = vmatpush1.msra.mxu0 0.0
        %2105 = vmatprep.subr.mxu0 0.0
        %2106 = vmatpush1.msra.mxu0 0.0
        %2107 = vmatprep.subr.mxu0 0.0
        %2108 = vmatpush1.msra.mxu0 0.0
        %2109 = vmatprep.subr.mxu0 0.0
        %2110 = vmatpush1.msra.mxu0 0.0
        %2111 = vmatprep.subr.mxu0 0.0
        %2112 = vmatpush1.msra.mxu0 0.0
        %2113 = vmatprep.subr.mxu0 0.0
        %2114 = vmatpush1.msra.mxu0 0.0
        %2115 = vmatprep.subr.mxu0 0.0
        %2116 = vmatpush1.msra.mxu0 0.0
        %2117 = vmatprep.subr.mxu0 0.0
        %2118 = vmatpush1.msra.mxu0 0.0
        %2119 = vmatprep.subr.mxu0 0.0
        %2120 = vmatpush1.msra.mxu0 0.0
        %2121 = vmatprep.subr.mxu0 0.0
        %2122 = vmatpush1.msra.mxu0 0.0
        %2123 = vmatprep.subr.mxu0 0.0
        %2124 = vmatpush1.msra.mxu0 0.0
        %2125 = vmatprep.subr.mxu0 0.0
        %2126 = vmatpush1.msra.mxu0 0.0
        %2127 = vmatprep.subr.mxu0 0.0
        %2128 = vmatpush1.msra.mxu0 0.0
        %2129 = vmatprep.subr.mxu0 0.0
        %2130 = vmatpush1.msra.mxu0 0.0
        %2131 = vmatprep.subr.mxu0 0.0
        %2132 = vmatpush1.msra.mxu0 0.0
        %2133 = vmatprep.subr.mxu0 0.0
        %2134 = vmatpush1.msra.mxu0 0.0
        %2135 = vmatprep.subr.mxu0 0.0
        %2136 = vmatpush1.msra.mxu0 0.0
        %2137 = vmatprep.subr.mxu0 0.0
        %2138 = vmatpush1.msra.mxu0 0.0
        %2139 = vmatprep.subr.mxu0 0.0
        %2140 = vmatpush1.msra.mxu0 0.0
        %2141 = vmatprep.subr.mxu0 0.0
        %2142 = vmatpush1.msra.mxu0 0.0
        %2143 = vmatprep.mubr.f32.mxu0 0.0
        %v2144 = vand.u32 %v1572, 4294901760
        %2145 = vmatmul.mubr.f32.gmra.mrb[0].mxu0 %v2144
        %v2146 = vpop.f32.mrb[0].mxu0
        %v2147 = vadd.f32 %v2024, %v2146
        %v2148 = vpop.f32.mrb[0].mxu0
        %v2149 = vadd.f32 %v2026, %v2148
        %2150 = vmatprep.mubr.f32.mxu0 0.0
        %v2151 = vand.u32 %v1575, 4294901760
        %2152 = vmatmul.mubr.f32.gmra.mrb[0].mxu0 %v2151
        %v2153 = vpop.f32.mrb[0].mxu0
        %v2154 = vadd.f32 %v2033, %v2153
        %v2155 = vpop.f32.mrb[0].mxu0
        %v2156 = vadd.f32 %v2035, %v2155
        %2157 = vmatprep.mubr.f32.mxu0 0.0
        %v2158 = vand.u32 %v1578, 4294901760
        %2159 = vmatmul.mubr.f32.gmra.mrb[0].mxu0 %v2158
        %v2160 = vpop.f32.mrb[0].mxu0
        %v2161 = vadd.f32 %v2042, %v2160
        %v2162 = vpop.f32.mrb[0].mxu0
        %v2163 = vadd.f32 %v2044, %v2162
        %2164 = vmatprep.mubr.f32.mxu0 0.0
        %v2165 = vand.u32 %v1581, 4294901760
        %2166 = vmatmul.mubr.f32.gmra.mrb[0].mxu0 %v2165
        %v2167 = vpop.f32.mrb[0].mxu0
        %v2168 = vadd.f32 %v2051, %v2167
        %v2169 = vpop.f32.mrb[0].mxu0
        %v2170 = vadd.f32 %v2053, %v2169
        %2171 = vdwg.mxu0
        %v2172 = vand.u32 %v1564, 4294901760
        %2173 = vmatprep.subr.mxu0 %v2172
        %v2174 = vand.u32 %v1563, 4294901760
        %2175 = vmatpush1.msra.mxu0 %v2174
        %v2176 = vand.u32 %v1566, 4294901760
        %2177 = vmatprep.subr.mxu0 %v2176
        %v2178 = vand.u32 %v1565, 4294901760
        %2179 = vmatpush1.msra.mxu0 %v2178
        %v2180 = vand.u32 %v1568, 4294901760
        %2181 = vmatprep.subr.mxu0 %v2180
        %v2182 = vand.u32 %v1567, 4294901760
        %2183 = vmatpush1.msra.mxu0 %v2182
        %v2184 = vand.u32 %v1570, 4294901760
        %2185 = vmatprep.subr.mxu0 %v2184
        %v2186 = vand.u32 %v1569, 4294901760
        %2187 = vmatpush1.msra.mxu0 %v2186
        %2188 = vmatprep.subr.mxu0 0.0
        %2189 = vmatpush1.msra.mxu0 0.0
        %2190 = vmatprep.subr.mxu0 0.0
        %2191 = vmatpush1.msra.mxu0 0.0
        %2192 = vmatprep.subr.mxu0 0.0
        %2193 = vmatpush1.msra.mxu0 0.0
        %2194 = vmatprep.subr.mxu0 0.0
        %2195 = vmatpush1.msra.mxu0 0.0
        %2196 = vmatprep.subr.mxu0 0.0
        %2197 = vmatpush1.msra.mxu0 0.0
        %2198 = vmatprep.subr.mxu0 0.0
        %2199 = vmatpush1.msra.mxu0 0.0
        %2200 = vmatprep.subr.mxu0 0.0
        %2201 = vmatpush1.msra.mxu0 0.0
        %2202 = vmatprep.subr.mxu0 0.0
        %2203 = vmatpush1.msra.mxu0 0.0
        %2204 = vmatprep.subr.mxu0 0.0
        %2205 = vmatpush1.msra.mxu0 0.0
        %2206 = vmatprep.subr.mxu0 0.0
        %2207 = vmatpush1.msra.mxu0 0.0
        %2208 = vmatprep.subr.mxu0 0.0
        %2209 = vmatpush1.msra.mxu0 0.0
        %2210 = vmatprep.subr.mxu0 0.0
        %2211 = vmatpush1.msra.mxu0 0.0
        %2212 = vmatprep.subr.mxu0 0.0
        %2213 = vmatpush1.msra.mxu0 0.0
        %2214 = vmatprep.subr.mxu0 0.0
        %2215 = vmatpush1.msra.mxu0 0.0
        %2216 = vmatprep.subr.mxu0 0.0
        %2217 = vmatpush1.msra.mxu0 0.0
        %2218 = vmatprep.subr.mxu0 0.0
        %2219 = vmatpush1.msra.mxu0 0.0
        %2220 = vmatprep.subr.mxu0 0.0
        %2221 = vmatpush1.msra.mxu0 0.0
        %2222 = vmatprep.subr.mxu0 0.0
        %2223 = vmatpush1.msra.mxu0 0.0
        %2224 = vmatprep.subr.mxu0 0.0
        %2225 = vmatpush1.msra.mxu0 0.0
        %2226 = vmatprep.subr.mxu0 0.0
        %2227 = vmatpush1.msra.mxu0 0.0
        %2228 = vmatprep.subr.mxu0 0.0
        %2229 = vmatpush1.msra.mxu0 0.0
        %2230 = vmatprep.subr.mxu0 0.0
        %2231 = vmatpush1.msra.mxu0 0.0
        %2232 = vmatprep.subr.mxu0 0.0
        %2233 = vmatpush1.msra.mxu0 0.0
        %2234 = vmatprep.subr.mxu0 0.0
        %2235 = vmatpush1.msra.mxu0 0.0
        %2236 = vmatprep.subr.mxu0 0.0
        %2237 = vmatpush1.msra.mxu0 0.0
        %2238 = vmatprep.subr.mxu0 0.0
        %2239 = vmatpush1.msra.mxu0 0.0
        %2240 = vmatprep.subr.mxu0 0.0
        %2241 = vmatpush1.msra.mxu0 0.0
        %2242 = vmatprep.subr.mxu0 0.0
        %2243 = vmatpush1.msra.mxu0 0.0
        %2244 = vmatprep.mubr.f32.mxu0 0.0
        %v2245 = vand.u32 %v1572, 4294901760
        %2246 = vmatmul.mubr.f32.gmra.mrb[0].mxu0 %v2245
        %v2247 = vpop.f32.mrb[0].mxu0
        %v2248 = vadd.f32 %v2147, %v2247
        %v2249 = vpop.f32.mrb[0].mxu0
        %v2250 = vadd.f32 %v2149, %v2249
        %2251 = vmatprep.mubr.f32.mxu0 0.0
        %v2252 = vand.u32 %v1575, 4294901760
        %2253 = vmatmul.mubr.f32.gmra.mrb[0].mxu0 %v2252
        %v2254 = vpop.f32.mrb[0].mxu0
        %v2255 = vadd.f32 %v2154, %v2254
        %v2256 = vpop.f32.mrb[0].mxu0
        %v2257 = vadd.f32 %v2156, %v2256
        %2258 = vmatprep.mubr.f32.mxu0 0.0
        %v2259 = vand.u32 %v1578, 4294901760
        %2260 = vmatmul.mubr.f32.gmra.mrb[0].mxu0 %v2259
        %v2261 = vpop.f32.mrb[0].mxu0
        %v2262 = vadd.f32 %v2161, %v2261
        %v2263 = vpop.f32.mrb[0].mxu0
        %v2264 = vadd.f32 %v2163, %v2263
        %2265 = vmatprep.mubr.f32.mxu0 0.0
        %v2266 = vand.u32 %v1581, 4294901760
        %2267 = vmatmul.mubr.f32.gmra.mrb[0].mxu0 %v2266
        %v2268 = vpop.f32.mrb[0].mxu0
        %v2269 = vadd.f32 %v2168, %v2268
        %v2270 = vpop.f32.mrb[0].mxu0
        %v2271 = vadd.f32 %v2170, %v2270
        %2272 = vdwg.mxu0
        %v2273 = vld [vmem:[%s6] sm:$0xff]
        %v2274 = vld [vmem:[%s6 + $0x8] sm:$0xff]
        %v2275 = vld [vmem:[%s6 + $0x10] sm:$0xff]
        %v2276 = vld [vmem:[%s6 + $0x18] sm:$0xff]
        %2278 = vset.pattern.permute.xlu0 0
        %2279 = vperm.xlu0 %2278, %v2273
        %v2280 = vpop.permute.xlu0 %2279
        %2283 = vset.pattern.permute.xlu0 0
        %2284 = vperm.xlu0 %2283, %v2274
        %v2285 = vpop.permute.xlu0 %2284
        %2288 = vset.pattern.permute.xlu0 0
        %2289 = vperm.xlu0 %2288, %v2275
        %v2290 = vpop.permute.xlu0 %2289
        %2293 = vset.pattern.permute.xlu0 0
        %2294 = vperm.xlu0 %2293, %v2276
        %v2295 = vpop.permute.xlu0 %2294
        %v2297 = vadd.f32 %v2248, %v2280
        %v2298 = vadd.f32 %v2250, %v2280
        %v2299 = vadd.f32 %v2255, %v2285
        %v2300 = vadd.f32 %v2257, %v2285
        %v2301 = vadd.f32 %v2262, %v2290
        %v2302 = vadd.f32 %v2264, %v2290
        %v2303 = vadd.f32 %v2269, %v2295
        %v2304 = vadd.f32 %v2271, %v2295
        %v2305 = vmul.f32 %v2297, 0.5
        %v2306 = vmul.f32 %v2298, 0.5
        %v2307 = vmul.f32 %v2299, 0.5
        %v2308 = vmul.f32 %v2300, 0.5
        %v2309 = vmul.f32 %v2301, 0.5
        %v2310 = vmul.f32 %v2302, 0.5
        %v2311 = vmul.f32 %v2303, 0.5
        %v2312 = vmul.f32 %v2304, 0.5
        %v2313 = vtanh.pop %v2305
        %v2314 = vtanh.pop %v2306
        %v2315 = vtanh.pop %v2307
        %v2316 = vtanh.pop %v2308
        %v2317 = vtanh.pop %v2309
        %v2318 = vtanh.pop %v2310
        %v2319 = vtanh.pop %v2311
        %v2320 = vtanh.pop %v2312
        %v2321 = vmul.f32 %v2313, 0.5
        %v2322 = vmul.f32 %v2314, 0.5
        %v2323 = vmul.f32 %v2315, 0.5
        %v2324 = vmul.f32 %v2316, 0.5
        %v2325 = vmul.f32 %v2317, 0.5
        %v2326 = vmul.f32 %v2318, 0.5
        %v2327 = vmul.f32 %v2319, 0.5
        %v2328 = vmul.f32 %v2320, 0.5
        %v2329 = vadd.f32 %v2321, 0.5
        %v2330 = vadd.f32 %v2322, 0.5
        %v2331 = vadd.f32 %v2323, 0.5
        %v2332 = vadd.f32 %v2324, 0.5
        %v2333 = vadd.f32 %v2325, 0.5
        %v2334 = vadd.f32 %v2326, 0.5
        %v2335 = vadd.f32 %v2327, 0.5
        %v2336 = vadd.f32 %v2328, 0.5
        %v2337 = vmul.f32 %v1522, %v277
        %v2338 = vmul.f32 %v1522, %v278
        %v2339 = vmul.f32 %v1526, %v279
        %v2340 = vmul.f32 %v1526, %v280
        %v2341 = vmul.f32 %v1530, %v281
        %v2342 = vmul.f32 %v1530, %v282
        %v2343 = vmul.f32 %v1534, %v283
        %v2344 = vmul.f32 %v1534, %v284
        %v2345 = vmul.f32 %v2329, %v2337
        %v2346 = vmul.f32 %v2330, %v2338
        %v2347 = vmul.f32 %v2331, %v2339
        %v2348 = vmul.f32 %v2332, %v2340
        %v2349 = vmul.f32 %v2333, %v2341
        %v2350 = vmul.f32 %v2334, %v2342
        %v2351 = vmul.f32 %v2335, %v2343
        %v2352 = vmul.f32 %v2336, %v2344
        %2353 = vst [vmem:[%s271] sm:$0xff] %v2345
        %2354 = vst [vmem:[%s271 + $0x8] sm:$0xff] %v2346
        %2355 = vst [vmem:[%s271 + $0x10] sm:$0xff] %v2347
        %2356 = vst [vmem:[%s271 + $0x18] sm:$0xff] %v2348
        %2357 = vst [vmem:[%s271 + $0x20] sm:$0xff] %v2349
        %2358 = vst [vmem:[%s271 + $0x28] sm:$0xff] %v2350
        %2359 = vst [vmem:[%s271 + $0x30] sm:$0xff] %v2351
        %2360 = vst [vmem:[%s271 + $0x38] sm:$0xff] %v2352
        %s2361 = sand.u32 %s181, 1
        %s2362 = scalar_lea.sflag [#allocation3], %s2361
        %s2363 = sand.u32 %s181, 1
        %s2364 = smul.addr %s2363, 64
        %s2365 = scalar_lea.vmem [#allocation2], %s2364
        // Predicated region
        $region49: #{tpu_custom_call.1} parent=47 // pred_check
          %p2366 = pneg %p191
        $region50: #{tpu_custom_call.1} parent=47 // pred_check_branch
          %2368 = sbr.rel (%p2366) target = $region52
        $region51: #{tpu_custom_call.1} parent=47 // pred_region
          %s2370 = ssub.s32 1024, 1024
          %2371 = vsyncadd %s2362, %s2370
          %s2372 = smul.addr %s21, 8
          %s2373 = smul.addr %s2372, 128
          %s2374 = scalar_lea.hbm %s7, %s2373
          %s2375 = sshll.u32 %s2365, 4
          %s2376 = int_to_ptr.vmem [resolvable:$true] %s2375
          %2381 = dma.vmem_to_hbm [thread:$0]  %s2376, 1024, %s2374, %s2362, 256, 256, 16
        $region52: #{tpu_custom_call.1} parent=47 // pred_fallthru
          _
      $region48: #{tpu_custom_call.1} parent=5 // pred_fallthru
        _
      %p2382 = scmp.le.s32.totalorder 2, %s16
      // Predicated region
      $region53: #{tpu_custom_call.1} parent=5 // pred_check
        %p2383 = pneg %p2382
      $region54: #{tpu_custom_call.1} parent=5 // pred_check_branch
        %2385 = sbr.rel (%p2383) target = $region56
      $region55: #{tpu_custom_call.1} parent=5 // pred_region
        %s2386 = ssub.s32 %s16, 2
        // Predicated region
        $region57: #{tpu_custom_call.1} parent=55 // pred_check
          %p2387 = pneg %p197
        $region58: #{tpu_custom_call.1} parent=55 // pred_check_branch
          %2389 = sbr.rel (%p2387) target = $region60
        $region59: #{tpu_custom_call.1} parent=55 // pred_region
          %s2390 = sand.u32 %s182, 1
          %s2391 = scalar_lea.sflag [#allocation3], %s2390
          %s2392 = sand.u32 %s182, 1
          %s2393 = smul.addr %s2392, 64
          %s2394 = scalar_lea.vmem [#allocation2], %s2393
          %2395 = dma.done %s2391, 1024
        $region60: #{tpu_custom_call.1} parent=55 // pred_fallthru
          _
      $region56: #{tpu_custom_call.1} parent=5 // pred_fallthru
        _
    $region6: #{tpu_custom_call.1} parent=1 // loop_footer
      %s20 = sadd.s32 1, %s16
    $region7: #{tpu_custom_call.1} parent=1 // loop_footer_branch
      %15 = sbr.rel target = $region3
    $region8: #{tpu_custom_call.1} parent=1 // loop_exit
      _
    %2396 = vsyncpa [#allocation3], 1
    %s2397 = scalar_lea.sflag [#allocation3], 1
    %2398 = vsyncpa %s2397, 1

</llo_original>
